<compile_context>
chip_gen: v7x
topology: tpu7x:2x2x1
jax: 0.10.0
libtpu: 0.0.40
codegen_flags: <defaults>
</compile_context>

<pallas_src>
import functools

import jax
import jax.numpy as jnp
from jax import lax
from jax.experimental import pallas as pl
from jax.experimental.pallas import tpu as pltpu


def _round_up(x, m):
    return ((x + m - 1) // m) * m


def _supcon_kernel(prow_ref, pcol_ref, tcol_ref, trow_ref, card_ref, out_ref,
                   s_strip, m_sc, mrow_sc, d_sc, nlog_sc,
                   *, inv_temperature, batch, block_rows, block_cols,
                   need_col_mask):
    r = pl.program_id(0)          # anchor-row block          (parallel)
    p = pl.program_id(1)          # pass: 0 = max, 1 = sums   (arbitrary)
    c = pl.program_id(2)          # key/column block          (arbitrary)
    last_c = pl.num_programs(2) - 1

    bm, bn = block_rows, block_cols
    n_fold = bn // 128            # lane-groups per tile (static)

    # ---------------- pass 0: matmul + cache + lane-wide partial max --------
    @pl.when(p == 0)
    def _():
        # [bm, bn] tempered score tile; contract dim 1 of both operands.
        s = lax.dot_general(
            prow_ref[...], pcol_ref[...],
            (((1,), (1,)), ((), ())),
            preferred_element_type=jnp.float32,
        ) * inv_temperature
        s_strip[c] = s            # cache for pass 1 (no second matmul)

        if need_col_mask:
            col_ids = c * bn + lax.broadcasted_iota(jnp.int32, (bm, bn), 1)
            sm = jnp.where(col_ids < batch, s, -jnp.inf)
        else:
            sm = s

        # Lane-wide partial max: static 128-lane slices, pure VPU maxes.
        part = sm[:, 0:128]
        for g in range(1, n_fold):
            part = jnp.maximum(part, sm[:, g * 128:(g + 1) * 128])

        @pl.when(c == 0)
        def _():
            m_sc[...] = jnp.full(m_sc.shape, -jnp.inf, dtype=m_sc.dtype)

        m_sc[...] = jnp.maximum(m_sc[...], part)

    # ---------------- pass 1: masked accumulation from the cached strip -----
    @pl.when(p == 1)
    def _():
        @pl.when(c == 0)
        def _():
            # One cross-lane max per row block (exact row max, diag included,
            # matching torch.max(dot_product_tempered, dim=1)).
            mrow_sc[...] = jnp.max(m_sc[...], axis=1, keepdims=True)
            d_sc[...] = jnp.zeros(d_sc.shape, dtype=d_sc.dtype)
            nlog_sc[...] = jnp.zeros(nlog_sc.shape, dtype=nlog_sc.dtype)

        s = s_strip[c]                                   # cached tempered tile
        e = jnp.exp(s - mrow_sc[...]) + 1e-5             # exp_dot_tempered
        log_e = jnp.log(e)

        row_ids = r * bm + lax.broadcasted_iota(jnp.int32, (bm, bn), 0)
        col_ids = c * bn + lax.broadcasted_iota(jnp.int32, (bm, bn), 1)
        anchor = row_ids != col_ids                      # j != i
        if need_col_mask:
            # Padded key columns (class 0 from jnp.pad) must never count as
            # positives or enter the denominator.
            anchor = anchor & (col_ids < batch)
        comb = anchor & (tcol_ref[...] == trow_ref[...])  # ... & same class

        d_tile = jnp.where(anchor, e, 0.0)
        n_tile = jnp.where(comb, log_e, 0.0)

        # Lane-wide partial sums: static 128-lane slices, pure VPU adds.
        d_part = d_tile[:, 0:128]
        n_part = n_tile[:, 0:128]
        for g in range(1, n_fold):
            d_part = d_part + d_tile[:, g * 128:(g + 1) * 128]
            n_part = n_part + n_tile[:, g * 128:(g + 1) * 128]

        d_sc[...] += d_part
        nlog_sc[...] += n_part

        @pl.when(c == last_c)
        def _():
            # One cross-lane reduce per accumulator per row block.
            denom = jnp.sum(d_sc[...], axis=1, keepdims=True)
            nsum = jnp.sum(nlog_sc[...], axis=1, keepdims=True)
            card = card_ref[...]
            # sum_j comb * (-log(e/denom)) == card*log(denom) - sum_j comb*log(e)
            per_row = card * jnp.log(denom) - nsum
            # Singleton classes give 0/0 = NaN (faithful to PyTorch); padded
            # rows are sliced off by the wrapper before the mean.
            out_ref[...] = per_row / card


def supervised_contrastive_loss(projections, targets, temperature=0.07):
    """projections: [B, D] float (f32/bf16), targets: [B] int -> scalar f32."""
    B, D = projections.shape
    Bp = _round_up(max(B, 1), 128)      # lane-dense padding (128, not 8)
    Dp = _round_up(max(D, 1), 128)
    itemsize = projections.dtype.itemsize

    # ---- tile selection --------------------------------------------------
    # Column block: keep the whole padded key matrix resident (constant
    # index map => DMA'd once) when it is small enough.
    if Bp * Dp * itemsize <= 4 * 1024 * 1024:
        bn = Bp
    elif Bp % 512 == 0:
        bn = 512
    elif Bp % 256 == 0:
        bn = 256
    else:
        bn = 128

    # Row block: as large as possible subject to
    #   * cached score strip (bm * Bp * 4 B) <= 12 MiB
    #   * >= 2 row blocks when Bp >= 256 so both v7x TensorCores get work.
    strip_cap = 12 * 1024 * 1024
    bm = 128
    for cand in (1024, 512, 256, 128):
        if Bp % cand != 0:
            continue
        if Bp >= 256 and Bp // cand < 2:
            continue
        if cand * Bp * 4 > strip_cap:
            continue
        bm = cand
        break

    n_r, n_c = Bp // bm, Bp // bn

    # ---- wrapper-side prep -------------------------------------------------
    # Zero-pad: extra D columns contribute 0 to dot products; padded rows /
    # columns are masked in-kernel / sliced off before the mean.
    proj_p = jnp.pad(projections, ((0, Bp - B), (0, Dp - D)))
    t = jnp.pad(targets.astype(jnp.int32), (0, Bp - B))
    t_col = t.reshape(Bp, 1)
    t_row = t.reshape(1, Bp)

    # Positive-pair cardinality per anchor (class count - 1); does not depend
    # on scores, so compute it once here instead of per score tile.
    tgt = targets.astype(jnp.int32)
    card = jnp.sum((tgt[:, None] == tgt[None, :]).astype(jnp.float32),
                   axis=1) - 1.0
    card_p = jnp.pad(card, (0, Bp - B), constant_values=1.0).reshape(Bp, 1)

    kernel = functools.partial(
        _supcon_kernel,
        inv_temperature=float(1.0 / temperature),
        batch=B, block_rows=bm, block_cols=bn,
        need_col_mask=(B != Bp))

    # Key columns track c during pass 0 only; pinned to the last block during
    # pass 1 (the cached strip is used instead), so no re-streaming.
    def pcol_index(r, p, c):
        return (c * (1 - p) + (n_c - 1) * p, 0)

    # VMEM budget estimate (double-buffered blocks + scratch) -> limit.
    vmem_est = (2 * (bm + bn) * Dp * itemsize      # prow + pcol blocks
                + n_c * bm * bn * 4                # cached score strip
                + 3 * bm * 128 * 4 + bm * 4        # accumulators
                + 6 * bm * 128 * 4 + 2 * 8 * bn * 4)  # small padded i/o blocks
    vmem_limit = int(min(max(vmem_est + (8 << 20), 32 << 20), 64 << 20))

    cost = pl.CostEstimate(
        flops=2 * Bp * Bp * Dp,                       # single P @ P.T pass
        transcendentals=2 * Bp * Bp,                  # exp + log tiles
        bytes_accessed=int((1 + n_r) * Bp * Dp * itemsize + 8 * Bp * 4))

    out = pl.pallas_call(
        kernel,
        out_shape=jax.ShapeDtypeStruct((Bp, 1), jnp.float32),
        grid_spec=pltpu.PrefetchScalarGridSpec(
            num_scalar_prefetch=0,
            grid=(n_r, 2, n_c),
            in_specs=[
                pl.BlockSpec((bm, Dp), lambda r, p, c: (r, 0)),   # anchor rows
                pl.BlockSpec((bn, Dp), pcol_index),               # key columns
                pl.BlockSpec((bm, 1), lambda r, p, c: (r, 0)),    # targets col
                pl.BlockSpec((1, bn), lambda r, p, c: (0, c)),    # targets row
                pl.BlockSpec((bm, 1), lambda r, p, c: (r, 0)),    # cardinality
            ],
            out_specs=pl.BlockSpec((bm, 1), lambda r, p, c: (r, 0)),
            scratch_shapes=[
                pltpu.VMEM((n_c, bm, bn), jnp.float32),   # cached score strip
                pltpu.VMEM((bm, 128), jnp.float32),       # lane-wide max
                pltpu.VMEM((bm, 1), jnp.float32),         # reduced row max
                pltpu.VMEM((bm, 128), jnp.float32),       # lane-wide denom
                pltpu.VMEM((bm, 128), jnp.float32),       # lane-wide sum log(e)
            ],
        ),
        compiler_params=pltpu.CompilerParams(
            dimension_semantics=("parallel", "arbitrary", "arbitrary"),
            vmem_limit_bytes=vmem_limit),
        cost_estimate=cost,
    )(proj_p, proj_p, t_col, t_row, card_p)

    # Final scalar mean over the B real anchors (tiny XLA reduce).
    return jnp.sum(out[:B, 0]) / B


def _reference_loss(projections, targets, temperature=0.07):
    # Pure-JAX mirror of the PyTorch forward, for the correctness check.
    p = projections.astype(jnp.float32)
    s = (p @ p.T) / temperature
    exp_s = jnp.exp(s - jnp.max(s, axis=1, keepdims=True)) + 1e-5
    mask_sim = (targets[:, None] == targets[None, :]).astype(jnp.float32)
    mask_anchor = 1.0 - jnp.eye(p.shape[0], dtype=jnp.float32)
    mask_comb = mask_sim * mask_anchor
    card = jnp.sum(mask_comb, axis=1)
    log_prob = -jnp.log(exp_s / jnp.sum(exp_s * mask_anchor, axis=1, keepdims=True))
    per_sample = jnp.sum(log_prob * mask_comb, axis=1) / card
    return jnp.mean(per_sample)


if __name__ == "__main__":
    key = jax.random.PRNGKey(0)
    k1, k2, k3 = jax.random.split(key, 3)

    # Primary case: B=8, D=32, every class has >= 2 samples (padded path).
    B, D = 8, 32
    proj = jax.random.normal(k1, (B, D), dtype=jnp.float32)
    proj = proj / jnp.linalg.norm(proj, axis=1, keepdims=True)
    tgt = jnp.array([0, 0, 1, 1, 2, 2, 3, 3], dtype=jnp.int32)

    loss = supervised_contrastive_loss(proj, tgt, temperature=0.07)
    jax.block_until_ready(loss)
    ref = _reference_loss(proj, tgt, temperature=0.07)
    assert jnp.allclose(loss, ref, rtol=1e-4, atol=1e-5), (loss, ref)

    # Unaligned case exercising the B/D zero-padding + masking path.
    B2, D2 = 12, 40
    proj2 = jax.random.normal(k2, (B2, D2), dtype=jnp.float32)
    proj2 = proj2 / jnp.linalg.norm(proj2, axis=1, keepdims=True)
    tgt2 = jnp.array([0, 0, 0, 1, 1, 1, 2, 2, 2, 3, 3, 3], dtype=jnp.int32)

    loss2 = supervised_contrastive_loss(proj2, tgt2, temperature=0.07)
    jax.block_until_ready(loss2)
    ref2 = _reference_loss(proj2, tgt2, temperature=0.07)
    assert jnp.allclose(loss2, ref2, rtol=1e-4, atol=1e-5), (loss2, ref2)

    # Aligned case: exercises the no-column-mask specialization, multiple row
    # blocks (parallel axis), the cached score strip and the pinned key index.
    B3, D3 = 256, 128
    proj3 = jax.random.normal(k3, (B3, D3), dtype=jnp.float32)
    proj3 = proj3 / jnp.linalg.norm(proj3, axis=1, keepdims=True)
    tgt3 = (jnp.arange(B3, dtype=jnp.int32) % 64)      # each class appears 4x

    loss3 = supervised_contrastive_loss(proj3, tgt3, temperature=0.07)
    jax.block_until_ready(loss3)
    ref3 = _reference_loss(proj3, tgt3, temperature=0.07)
    assert jnp.allclose(loss3, ref3, rtol=5e-4, atol=1e-5), (loss3, ref3)

    print("KERNEL_OK")
</pallas_src>

<mosaic_0001>
module attributes {stable_mosaic.version = 11 : i64} {
  func.func @_supcon_kernel(%arg0: i32, %arg1: i32, %arg2: i32, %arg3: memref<128x128xf32, #tpu.memory_space<vmem>>, %arg4: memref<128x128xf32, #tpu.memory_space<vmem>>, %arg5: memref<128x1xi32, #tpu.memory_space<vmem>>, %arg6: memref<1x128xi32, #tpu.memory_space<vmem>>, %arg7: memref<128x1xf32, #tpu.memory_space<vmem>>, %arg8: memref<128x1xf32, #tpu.memory_space<vmem>>, %arg9: memref<1x128x128xf32, #tpu.memory_space<vmem>>, %arg10: memref<128x128xf32, #tpu.memory_space<vmem>>, %arg11: memref<128x1xf32, #tpu.memory_space<vmem>>, %arg12: memref<128x128xf32, #tpu.memory_space<vmem>>, %arg13: memref<128x128xf32, #tpu.memory_space<vmem>>) attributes {dimension_semantics = [#tpu.dimension_semantics<parallel>, #tpu.dimension_semantics<arbitrary>, #tpu.dimension_semantics<arbitrary>], iteration_bounds = array<i64: 1, 2, 1>, scalar_prefetch = 0 : i64, scratch_operands = 5 : i64, tpu.core_type = #tpu.core_type<tc>, window_params = [{transform_indices = @transform_0, window_bounds = array<i64: 128, 128>}, {transform_indices = @transform_1, window_bounds = array<i64: 128, 128>}, {transform_indices = @transform_2, window_bounds = array<i64: 128, 1>}, {transform_indices = @transform_3, window_bounds = array<i64: 1, 128>}, {transform_indices = @transform_4, window_bounds = array<i64: 128, 1>}, {transform_indices = @transform_5, window_bounds = array<i64: 128, 1>}]} {
    %c0_i32 = arith.constant 0 : i32
    %0 = arith.cmpi eq, %arg1, %c0_i32 : i32
    %1 = arith.extui %0 : i1 to i32
    %c0_i32_0 = arith.constant 0 : i32
    %2 = arith.cmpi ne, %1, %c0_i32_0 : i32
    scf.if %2 {
      %c0 = arith.constant 0 : index
      %c0_2 = arith.constant 0 : index
      %6 = vector.load %arg3[%c0, %c0_2] : memref<128x128xf32, #tpu.memory_space<vmem>>, vector<128x128xf32>
      %c0_3 = arith.constant 0 : index
      %c0_4 = arith.constant 0 : index
      %7 = vector.load %arg4[%c0_3, %c0_4] : memref<128x128xf32, #tpu.memory_space<vmem>>, vector<128x128xf32>
      %cst = arith.constant dense<0.000000e+00> : vector<128x128xf32>
      %8 = tpu.matmul %6, %7, %cst {dimension_numbers = #tpu.dot_dimension_numbers<[1], [1], [0], [0], [0, 0, 1, 0], [], []>} : vector<128x128xf32>, vector<128x128xf32>, vector<128x128xf32> -> vector<128x128xf32>
      %cst_5 = arith.constant 14.2857141 : f32
      %9 = vector.broadcast %cst_5 : f32 to vector<128x128xf32>
      %10 = arith.mulf %8, %9 : vector<128x128xf32>
      %11 = arith.index_cast %arg2 : i32 to index
      %c0_6 = arith.constant 0 : index
      %c0_7 = arith.constant 0 : index
      %12 = vector.load %arg9[%11, %c0_6, %c0_7] : memref<1x128x128xf32, #tpu.memory_space<vmem>>, vector<1x128x128xf32>
      %13 = vector.shape_cast %12 : vector<1x128x128xf32> to vector<128x128xf32>
      %14 = vector.shape_cast %10 : vector<128x128xf32> to vector<1x128x128xf32>
      tpu.vector_store %arg9[%11, %c0_6, %c0_7], %14 {strides = array<i32>} : memref<1x128x128xf32, #tpu.memory_space<vmem>>, vector<1x128x128xf32>,
      %c128_i32 = arith.constant 128 : i32
      %15 = arith.muli %arg2, %c128_i32 : i32
      %16 = tpu.iota {dimensions = array<i32: 1>} : vector<128x128xi32>
      %17 = vector.broadcast %15 : i32 to vector<128x128xi32>
      %18 = arith.addi %17, %16 : vector<128x128xi32>
      %c8_i32 = arith.constant 8 : i32
      %19 = vector.broadcast %c8_i32 : i32 to vector<128x128xi32>
      %20 = arith.cmpi slt, %18, %19 : vector<128x128xi32>
      %cst_8 = arith.constant 0xFF800000 : f32
      %21 = vector.broadcast %cst_8 : f32 to vector<128x128xf32>
      %22 = arith.select %20, %10, %21 : vector<128x128xi1>, vector<128x128xf32>
      %c0_i32_9 = arith.constant 0 : i32
      %23 = arith.cmpi eq, %arg2, %c0_i32_9 : i32
      %24 = arith.extui %23 : i1 to i32
      %c0_i32_10 = arith.constant 0 : i32
      %25 = arith.cmpi ne, %24, %c0_i32_10 : i32
      scf.if %25 {
        %cst_15 = arith.constant 0xFF800000 : f32
        %29 = vector.broadcast %cst_15 : f32 to vector<128x128xf32>
        %c0_16 = arith.constant 0 : index
        %c0_17 = arith.constant 0 : index
        %30 = vector.load %arg10[%c0_16, %c0_17] : memref<128x128xf32, #tpu.memory_space<vmem>>, vector<128x128xf32>
        tpu.vector_store %arg10[%c0_16, %c0_17], %29 {strides = array<i32>} : memref<128x128xf32, #tpu.memory_space<vmem>>, vector<128x128xf32>,
      } else {
      }
      %c0_11 = arith.constant 0 : index
      %c0_12 = arith.constant 0 : index
      %26 = vector.load %arg10[%c0_11, %c0_12] : memref<128x128xf32, #tpu.memory_space<vmem>>, vector<128x128xf32>
      %27 = arith.maximumf %26, %22 : vector<128x128xf32>
      %c0_13 = arith.constant 0 : index
      %c0_14 = arith.constant 0 : index
      %28 = vector.load %arg10[%c0_13, %c0_14] : memref<128x128xf32, #tpu.memory_space<vmem>>, vector<128x128xf32>
      tpu.vector_store %arg10[%c0_13, %c0_14], %27 {strides = array<i32>} : memref<128x128xf32, #tpu.memory_space<vmem>>, vector<128x128xf32>,
    } else {
    }
    %c1_i32 = arith.constant 1 : i32
    %3 = arith.cmpi eq, %arg1, %c1_i32 : i32
    %4 = arith.extui %3 : i1 to i32
    %c0_i32_1 = arith.constant 0 : i32
    %5 = arith.cmpi ne, %4, %c0_i32_1 : i32
    scf.if %5 {
      %c0_i32_2 = arith.constant 0 : i32
      %6 = arith.cmpi eq, %arg2, %c0_i32_2 : i32
      %7 = arith.extui %6 : i1 to i32
      %c0_i32_3 = arith.constant 0 : i32
      %8 = arith.cmpi ne, %7, %c0_i32_3 : i32
      scf.if %8 {
        %c0_24 = arith.constant 0 : index
        %c0_25 = arith.constant 0 : index
        %50 = vector.load %arg10[%c0_24, %c0_25] : memref<128x128xf32, #tpu.memory_space<vmem>>, vector<128x128xf32>
        %cst_26 = arith.constant dense<0xFF800000> : vector<128xf32>
        %51 = vector.multi_reduction <maximumf>, %50, %cst_26 [1] : vector<128x128xf32> to vector<128xf32>
        %52 = vector.shape_cast %51 : vector<128xf32> to vector<128x1xf32>
        %c0_27 = arith.constant 0 : index
        %c0_28 = arith.constant 0 : index
        %53 = vector.load %arg11[%c0_27, %c0_28] : memref<128x1xf32, #tpu.memory_space<vmem>>, vector<128x1xf32>
        tpu.vector_store %arg11[%c0_27, %c0_28], %52 {strides = array<i32>} : memref<128x1xf32, #tpu.memory_space<vmem>>, vector<128x1xf32>,
        %cst_29 = arith.constant 0.000000e+00 : f32
        %54 = vector.broadcast %cst_29 : f32 to vector<128x128xf32>
        %c0_30 = arith.constant 0 : index
        %c0_31 = arith.constant 0 : index
        %55 = vector.load %arg12[%c0_30, %c0_31] : memref<128x128xf32, #tpu.memory_space<vmem>>, vector<128x128xf32>
        tpu.vector_store %arg12[%c0_30, %c0_31], %54 {strides = array<i32>} : memref<128x128xf32, #tpu.memory_space<vmem>>, vector<128x128xf32>,
        %cst_32 = arith.constant 0.000000e+00 : f32
        %56 = vector.broadcast %cst_32 : f32 to vector<128x128xf32>
        %c0_33 = arith.constant 0 : index
        %c0_34 = arith.constant 0 : index
        %57 = vector.load %arg13[%c0_33, %c0_34] : memref<128x128xf32, #tpu.memory_space<vmem>>, vector<128x128xf32>
        tpu.vector_store %arg13[%c0_33, %c0_34], %56 {strides = array<i32>} : memref<128x128xf32, #tpu.memory_space<vmem>>, vector<128x128xf32>,
      } else {
      }
      %9 = arith.index_cast %arg2 : i32 to index
      %c0 = arith.constant 0 : index
      %c0_4 = arith.constant 0 : index
      %10 = vector.load %arg9[%9, %c0, %c0_4] : memref<1x128x128xf32, #tpu.memory_space<vmem>>, vector<1x128x128xf32>
      %11 = vector.shape_cast %10 : vector<1x128x128xf32> to vector<128x128xf32>
      %c0_5 = arith.constant 0 : index
      %c0_6 = arith.constant 0 : index
      %12 = vector.load %arg11[%c0_5, %c0_6] : memref<128x1xf32, #tpu.memory_space<vmem>>, vector<128x1xf32>
      %13 = vector.broadcast %12 : vector<128x1xf32> to vector<128x128xf32>
      %14 = arith.subf %11, %13 : vector<128x128xf32>
      %15 = math.exp %14 : vector<128x128xf32>
      %cst = arith.constant 9.99999974E-6 : f32
      %16 = vector.broadcast %cst : f32 to vector<128x128xf32>
      %17 = arith.addf %15, %16 : vector<128x128xf32>
      %18 = math.log %17 : vector<128x128xf32>
      %c128_i32 = arith.constant 128 : i32
      %19 = arith.muli %arg0, %c128_i32 : i32
      %20 = tpu.iota {dimensions = array<i32: 0>} : vector<128x128xi32>
      %21 = vector.broadcast %19 : i32 to vector<128x128xi32>
      %22 = arith.addi %21, %20 : vector<128x128xi32>
      %c128_i32_7 = arith.constant 128 : i32
      %23 = arith.muli %arg2, %c128_i32_7 : i32
      %24 = tpu.iota {dimensions = array<i32: 1>} : vector<128x128xi32>
      %25 = vector.broadcast %23 : i32 to vector<128x128xi32>
      %26 = arith.addi %25, %24 : vector<128x128xi32>
      %27 = arith.cmpi ne, %22, %26 : vector<128x128xi32>
      %c8_i32 = arith.constant 8 : i32
      %28 = vector.broadcast %c8_i32 : i32 to vector<128x128xi32>
      %29 = arith.cmpi slt, %26, %28 : vector<128x128xi32>
      %30 = arith.andi %27, %29 : vector<128x128xi1>
      %c0_8 = arith.constant 0 : index
      %c0_9 = arith.constant 0 : index
      %31 = vector.load %arg5[%c0_8, %c0_9] : memref<128x1xi32, #tpu.memory_space<vmem>>, vector<128x1xi32>
      %c0_10 = arith.constant 0 : index
      %c0_11 = arith.constant 0 : index
      %32 = vector.load %arg6[%c0_10, %c0_11] : memref<1x128xi32, #tpu.memory_space<vmem>>, vector<1x128xi32>
      %33 = vector.broadcast %31 : vector<128x1xi32> to vector<128x128xi32>
      %34 = vector.broadcast %32 : vector<1x128xi32> to vector<128x128xi32>
      %35 = arith.cmpi eq, %33, %34 : vector<128x128xi32>
      %36 = arith.andi %30, %35 : vector<128x128xi1>
      %cst_12 = arith.constant 0.000000e+00 : f32
      %37 = vector.broadcast %cst_12 : f32 to vector<128x128xf32>
      %38 = arith.select %30, %17, %37 : vector<128x128xi1>, vector<128x128xf32>
      %cst_13 = arith.constant 0.000000e+00 : f32
      %39 = vector.broadcast %cst_13 : f32 to vector<128x128xf32>
      %40 = arith.select %36, %18, %39 : vector<128x128xi1>, vector<128x128xf32>
      %c0_14 = arith.constant 0 : index
      %c0_15 = arith.constant 0 : index
      %41 = vector.load %arg12[%c0_14, %c0_15] : memref<128x128xf32, #tpu.memory_space<vmem>>, vector<128x128xf32>
      %42 = arith.addf %41, %38 : vector<128x128xf32>
      %c0_16 = arith.constant 0 : index
      %c0_17 = arith.constant 0 : index
      %43 = vector.load %arg12[%c0_16, %c0_17] : memref<128x128xf32, #tpu.memory_space<vmem>>, vector<128x128xf32>
      tpu.vector_store %arg12[%c0_16, %c0_17], %42 {strides = array<i32>} : memref<128x128xf32, #tpu.memory_space<vmem>>, vector<128x128xf32>,
      %c0_18 = arith.constant 0 : index
      %c0_19 = arith.constant 0 : index
      %44 = vector.load %arg13[%c0_18, %c0_19] : memref<128x128xf32, #tpu.memory_space<vmem>>, vector<128x128xf32>
      %45 = arith.addf %44, %40 : vector<128x128xf32>
      %c0_20 = arith.constant 0 : index
      %c0_21 = arith.constant 0 : index
      %46 = vector.load %arg13[%c0_20, %c0_21] : memref<128x128xf32, #tpu.memory_space<vmem>>, vector<128x128xf32>
      tpu.vector_store %arg13[%c0_20, %c0_21], %45 {strides = array<i32>} : memref<128x128xf32, #tpu.memory_space<vmem>>, vector<128x128xf32>,
      %c0_i32_22 = arith.constant 0 : i32
      %47 = arith.cmpi eq, %arg2, %c0_i32_22 : i32
      %48 = arith.extui %47 : i1 to i32
      %c0_i32_23 = arith.constant 0 : i32
      %49 = arith.cmpi ne, %48, %c0_i32_23 : i32
      scf.if %49 {
        %c0_24 = arith.constant 0 : index
        %c0_25 = arith.constant 0 : index
        %50 = vector.load %arg12[%c0_24, %c0_25] : memref<128x128xf32, #tpu.memory_space<vmem>>, vector<128x128xf32>
        %cst_26 = arith.constant dense<0.000000e+00> : vector<128xf32>
        %51 = vector.multi_reduction <add>, %50, %cst_26 [1] : vector<128x128xf32> to vector<128xf32>
        %52 = vector.shape_cast %51 : vector<128xf32> to vector<128x1xf32>
        %c0_27 = arith.constant 0 : index
        %c0_28 = arith.constant 0 : index
        %53 = vector.load %arg13[%c0_27, %c0_28] : memref<128x128xf32, #tpu.memory_space<vmem>>, vector<128x128xf32>
        %cst_29 = arith.constant dense<0.000000e+00> : vector<128xf32>
        %54 = vector.multi_reduction <add>, %53, %cst_29 [1] : vector<128x128xf32> to vector<128xf32>
        %55 = vector.shape_cast %54 : vector<128xf32> to vector<128x1xf32>
        %c0_30 = arith.constant 0 : index
        %c0_31 = arith.constant 0 : index
        %56 = vector.load %arg7[%c0_30, %c0_31] : memref<128x1xf32, #tpu.memory_space<vmem>>, vector<128x1xf32>
        %57 = math.log %52 : vector<128x1xf32>
        %58 = arith.mulf %56, %57 : vector<128x1xf32>
        %59 = arith.subf %58, %55 : vector<128x1xf32>
        %60 = arith.divf %59, %56 : vector<128x1xf32>
        %c0_32 = arith.constant 0 : index
        %c0_33 = arith.constant 0 : index
        %61 = vector.load %arg8[%c0_32, %c0_33] : memref<128x1xf32, #tpu.memory_space<vmem>>, vector<128x1xf32>
        tpu.vector_store %arg8[%c0_32, %c0_33], %60 {strides = array<i32>} : memref<128x1xf32, #tpu.memory_space<vmem>>, vector<128x1xf32>,
      } else {
      }
    } else {
    }
    return
  }
  func.func @transform_0(%arg0: i32, %arg1: i32, %arg2: i32) -> (i32, i32) {
    %c0_i32 = arith.constant 0 : i32
    %c0_i32_0 = arith.constant 0 : i32
    return %arg0, %c0_i32 : i32, i32
  }
  func.func @transform_1(%arg0: i32, %arg1: i32, %arg2: i32) -> (i32, i32) {
    %c1_i32 = arith.constant 1 : i32
    %0 = arith.subi %c1_i32, %arg1 : i32
    %1 = arith.muli %arg2, %0 : i32
    %c0_i32 = arith.constant 0 : i32
    %2 = arith.muli %c0_i32, %arg1 : i32
    %3 = arith.addi %1, %2 : i32
    %c0_i32_0 = arith.constant 0 : i32
    %c0_i32_1 = arith.constant 0 : i32
    return %3, %c0_i32_0 : i32, i32
  }
  func.func @transform_2(%arg0: i32, %arg1: i32, %arg2: i32) -> (i32, i32) {
    %c0_i32 = arith.constant 0 : i32
    %c0_i32_0 = arith.constant 0 : i32
    return %arg0, %c0_i32 : i32, i32
  }
  func.func @transform_3(%arg0: i32, %arg1: i32, %arg2: i32) -> (i32, i32) {
    %c0_i32 = arith.constant 0 : i32
    %c0_i32_0 = arith.constant 0 : i32
    return %c0_i32, %arg2 : i32, i32
  }
  func.func @transform_4(%arg0: i32, %arg1: i32, %arg2: i32) -> (i32, i32) {
    %c0_i32 = arith.constant 0 : i32
    %c0_i32_0 = arith.constant 0 : i32
    return %arg0, %c0_i32 : i32, i32
  }
  func.func @transform_5(%arg0: i32, %arg1: i32, %arg2: i32) -> (i32, i32) {
    %c0_i32 = arith.constant 0 : i32
    %c0_i32_0 = arith.constant 0 : i32
    return %arg0, %c0_i32 : i32, i32
  }
}

</mosaic_0001>

<llo_original>
// kernel: tpu_custom_call.1
$region0: #{tpu_custom_call.1}
  #allocation0 [shape = 'u32[]', space=smem, size = 0x4, offset = 0x4, fixed_abs, tag = 'smem constant byte address 0x4 - core index']
  #allocation1 [shape = 'u32[144,128]{1,0:T(1,128)}', space=vmem, size = 0x12000, scoped, tag = 'internal scratch']
  #allocation2 [shape = 'f32[1,128,128]{2,1,0:T(8,128)}', space=vmem, size = 0x10000, scoped, tag = 'scratch operand']
  #allocation3 [shape = 'f32[128,128]{1,0:T(8,128)}', space=vmem, size = 0x10000, scoped, tag = 'scratch operand']
  #allocation4 [shape = 'f32[128,1]{1,0:T(8,128)}', space=vmem, size = 0x10000, scoped, tag = 'scratch operand']
  #allocation5 [shape = 'f32[128,128]{1,0:T(8,128)}', space=vmem, size = 0x10000, scoped, tag = 'scratch operand']
  #allocation6 [shape = 'f32[128,128]{1,0:T(8,128)}', space=vmem, size = 0x10000, scoped, tag = 'scratch operand']
  %s0 = inlined_call_operand.vmem [shape: f32[128,128], index: 0, kind: input, shape index: {}]
  %s1 = inlined_call_operand.vmem [shape: f32[128,128], index: 1, kind: input, shape index: {}]
  %s2 = inlined_call_operand.vmem [shape: s32[128,1], index: 2, kind: input, shape index: {}]
  %s3 = inlined_call_operand.vmem [shape: s32[1,128], index: 3, kind: input, shape index: {}]
  %s4 = inlined_call_operand.vmem [shape: f32[128,1], index: 4, kind: input, shape index: {}]
  %s5 = inlined_call_operand.vmem [shape: f32[128,1], index: 5, kind: output, shape index: {}]
  %s6 = sld [smem:[#allocation0]]
  $region73: #{tpu_custom_call.1} parent=0
    _
  %s8 = ssub.s32 1, %s6
  %s9 = scalar_select 0, %s8, %s6
  loop: start=0, step=1, limit=4
  $region2: #{tpu_custom_call.1} parent=0 // loop_pre_header
    _
  $region3: #{tpu_custom_call.1} parent=0 // loop_header
    %s11 = sphi 0, %s15
    %p12 = scmp.ge.s32.totalorder %s11, 4
    %s18 = sphi 0, %s37
    %s19 = sphi 0, %s33
    %s20 = sphi 0, %s29
    %s21 = sphi 0, %s18
    %s22 = sphi 0, %s19
    %s23 = sphi 0, %s20
    %s24 = sphi 0, %s21
    %s25 = sphi 0, %s22
    %s26 = sphi 0, %s23
    %s40 = sphi 0, %s42
    %s43 = sphi 0, %s40
    %s44 = sphi 0, %s43
    %s60 = sphi 0, %s44
    %s70 = sphi 0, %s72
    %s73 = sphi 0, %s70
    %s74 = sphi 0, %s73
    %s90 = sphi 0, %s74
    %s96 = sphi 0, %s98
    %s99 = sphi 0, %s96
    %s100 = sphi 0, %s99
    %s116 = sphi 0, %s100
    %s122 = sphi 0, %s124
    %s125 = sphi 0, %s122
    %s126 = sphi 0, %s125
    %s142 = sphi 0, %s126
    %s148 = sphi 0, %s150
    %s151 = sphi 0, %s148
    %s152 = sphi 0, %s151
    %s168 = sphi 0, %s152
    %s174 = sphi 0, %s176
    %s177 = sphi 0, %s174
    %s178 = sphi 0, %s177
    %s194 = sphi 0, %s178
  $region4: #{tpu_custom_call.1} parent=0 // loop_header_branch
    %14 = sbr.rel (%p12) target = $region8
  $region5: #{tpu_custom_call.1} parent=0 // loop_body
    %s16 = ssub.s32 %s11, 1
    %s17 = ssub.s32 %s11, 2
    %s27 = sadd.s32 1, %s20
    %p28 = scmp.ge.s32.totalorder %s27, 1
    %s29 = scalar_select %p28, 0, %s27
    %s30 = sadd.s32 1, %s19
    %s31 = scalar_select %p28, %s30, %s19
    %p32 = scmp.ge.s32.totalorder %s31, 2
    %s33 = scalar_select %p32, 0, %s31
    %s34 = sadd.s32 1, %s18
    %s35 = scalar_select %p32, %s34, %s18
    %p36 = scmp.ge.s32.totalorder %s35, 1
    %s37 = scalar_select %p36, 0, %s35
    %s38 = ssub.s32 %s18, %s37
    %p39 = scmp.eq.s32.totalorder %s38, 0
    %s41 = sadd.s32 %s40, 1
    %s42 = scalar_select %p39, %s40, %s41
    %p45 = pneg %p39
    %p46 = scmp.eq.s32.totalorder %s11, 1
    %p47 = por %p45, %p46
    %p48 = scmp.ne.s32.totalorder %s40, %s43
    %p49 = scmp.eq.s32.totalorder %s11, 0
    %p50 = por %p48, %p49
    %p51 = scmp.ne.s32.totalorder %s40, %s43
    %p52 = scmp.eq.s32.totalorder %s16, 1
    %p53 = por %p51, %p52
    %p54 = scmp.ne.s32.totalorder %s43, %s44
    %p55 = scmp.eq.s32.totalorder %s16, 0
    %p56 = por %p54, %p55
    %p57 = scmp.ne.s32.totalorder %s43, %s44
    %p58 = scmp.eq.s32.totalorder %s17, 1
    %p59 = por %p57, %p58
    %p61 = scmp.ne.s32.totalorder %s44, %s60
    %p62 = scmp.eq.s32.totalorder %s17, 0
    %p63 = por %p61, %p62
    %s64 = ssub.s32 1, %s19
    %s65 = smul.u32 %s20, %s64
    %s66 = ssub.s32 1, %s33
    %s67 = smul.u32 %s29, %s66
    %s68 = ssub.s32 %s65, %s67
    %p69 = scmp.eq.s32.totalorder %s68, 0
    %s71 = sadd.s32 %s70, 1
    %s72 = scalar_select %p69, %s70, %s71
    %p75 = pneg %p69
    %p76 = scmp.eq.s32.totalorder %s11, 1
    %p77 = por %p75, %p76
    %p78 = scmp.ne.s32.totalorder %s70, %s73
    %p79 = scmp.eq.s32.totalorder %s11, 0
    %p80 = por %p78, %p79
    %p81 = scmp.ne.s32.totalorder %s70, %s73
    %p82 = scmp.eq.s32.totalorder %s16, 1
    %p83 = por %p81, %p82
    %p84 = scmp.ne.s32.totalorder %s73, %s74
    %p85 = scmp.eq.s32.totalorder %s16, 0
    %p86 = por %p84, %p85
    %p87 = scmp.ne.s32.totalorder %s73, %s74
    %p88 = scmp.eq.s32.totalorder %s17, 1
    %p89 = por %p87, %p88
    %p91 = scmp.ne.s32.totalorder %s74, %s90
    %p92 = scmp.eq.s32.totalorder %s17, 0
    %p93 = por %p91, %p92
    %s94 = ssub.s32 %s18, %s37
    %p95 = scmp.eq.s32.totalorder %s94, 0
    %s97 = sadd.s32 %s96, 1
    %s98 = scalar_select %p95, %s96, %s97
    %p101 = pneg %p95
    %p102 = scmp.eq.s32.totalorder %s11, 1
    %p103 = por %p101, %p102
    %p104 = scmp.ne.s32.totalorder %s96, %s99
    %p105 = scmp.eq.s32.totalorder %s11, 0
    %p106 = por %p104, %p105
    %p107 = scmp.ne.s32.totalorder %s96, %s99
    %p108 = scmp.eq.s32.totalorder %s16, 1
    %p109 = por %p107, %p108
    %p110 = scmp.ne.s32.totalorder %s99, %s100
    %p111 = scmp.eq.s32.totalorder %s16, 0
    %p112 = por %p110, %p111
    %p113 = scmp.ne.s32.totalorder %s99, %s100
    %p114 = scmp.eq.s32.totalorder %s17, 1
    %p115 = por %p113, %p114
    %p117 = scmp.ne.s32.totalorder %s100, %s116
    %p118 = scmp.eq.s32.totalorder %s17, 0
    %p119 = por %p117, %p118
    %s120 = ssub.s32 %s20, %s29
    %p121 = scmp.eq.s32.totalorder %s120, 0
    %s123 = sadd.s32 %s122, 1
    %s124 = scalar_select %p121, %s122, %s123
    %p127 = pneg %p121
    %p128 = scmp.eq.s32.totalorder %s11, 1
    %p129 = por %p127, %p128
    %p130 = scmp.ne.s32.totalorder %s122, %s125
    %p131 = scmp.eq.s32.totalorder %s11, 0
    %p132 = por %p130, %p131
    %p133 = scmp.ne.s32.totalorder %s122, %s125
    %p134 = scmp.eq.s32.totalorder %s16, 1
    %p135 = por %p133, %p134
    %p136 = scmp.ne.s32.totalorder %s125, %s126
    %p137 = scmp.eq.s32.totalorder %s16, 0
    %p138 = por %p136, %p137
    %p139 = scmp.ne.s32.totalorder %s125, %s126
    %p140 = scmp.eq.s32.totalorder %s17, 1
    %p141 = por %p139, %p140
    %p143 = scmp.ne.s32.totalorder %s126, %s142
    %p144 = scmp.eq.s32.totalorder %s17, 0
    %p145 = por %p143, %p144
    %s146 = ssub.s32 %s18, %s37
    %p147 = scmp.eq.s32.totalorder %s146, 0
    %s149 = sadd.s32 %s148, 1
    %s150 = scalar_select %p147, %s148, %s149
    %p153 = pneg %p147
    %p154 = scmp.eq.s32.totalorder %s11, 1
    %p155 = por %p153, %p154
    %p156 = scmp.ne.s32.totalorder %s148, %s151
    %p157 = scmp.eq.s32.totalorder %s11, 0
    %p158 = por %p156, %p157
    %p159 = scmp.ne.s32.totalorder %s148, %s151
    %p160 = scmp.eq.s32.totalorder %s16, 1
    %p161 = por %p159, %p160
    %p162 = scmp.ne.s32.totalorder %s151, %s152
    %p163 = scmp.eq.s32.totalorder %s16, 0
    %p164 = por %p162, %p163
    %p165 = scmp.ne.s32.totalorder %s151, %s152
    %p166 = scmp.eq.s32.totalorder %s17, 1
    %p167 = por %p165, %p166
    %p169 = scmp.ne.s32.totalorder %s152, %s168
    %p170 = scmp.eq.s32.totalorder %s17, 0
    %p171 = por %p169, %p170
    %s172 = ssub.s32 %s18, %s37
    %p173 = scmp.eq.s32.totalorder %s172, 0
    %s175 = sadd.s32 %s174, 1
    %s176 = scalar_select %p173, %s174, %s175
    %p179 = pneg %p173
    %p180 = scmp.eq.s32.totalorder %s11, 1
    %p181 = por %p179, %p180
    %p182 = scmp.ne.s32.totalorder %s174, %s177
    %p183 = scmp.eq.s32.totalorder %s11, 0
    %p184 = por %p182, %p183
    %p185 = scmp.ne.s32.totalorder %s174, %s177
    %p186 = scmp.eq.s32.totalorder %s16, 1
    %p187 = por %p185, %p186
    %p188 = scmp.ne.s32.totalorder %s177, %s178
    %p189 = scmp.eq.s32.totalorder %s16, 0
    %p190 = por %p188, %p189
    %p191 = scmp.ne.s32.totalorder %s177, %s178
    %p192 = scmp.eq.s32.totalorder %s17, 1
    %p193 = por %p191, %p192
    %p195 = scmp.ne.s32.totalorder %s178, %s194
    %p196 = scmp.eq.s32.totalorder %s17, 0
    %p197 = por %p195, %p196
    %p198 = scmp.le.s32.totalorder 1, %s11
    %p199 = scmp.lt.s32.totalorder %s11, 3
    %p200 = pnand %p198, %p199
    %p201 = pneg %p200
    // Predicated region
    $region9: #{tpu_custom_call.1} parent=5 // pred_check
      _
    $region10: #{tpu_custom_call.1} parent=5 // pred_check_branch
      %203 = sbr.rel (%p200) target = $region12
    $region11: #{tpu_custom_call.1} parent=5 // pred_region
      %s204 = ssub.s32 %s11, 1
      // Predicated region
      $region13: #{tpu_custom_call.1} parent=11 // pred_check
        %p205 = pneg %p56
      $region14: #{tpu_custom_call.1} parent=11 // pred_check_branch
        %207 = sbr.rel (%p205) target = $region16
      $region15: #{tpu_custom_call.1} parent=11 // pred_region
        %s208 = smul.u32 16, %s21
        %p209 = scmp.lt.s32.totalorder %s208, 15
        %s210 = scalar_select %p209, %s208, 15
        %s211 = smul.addr %s210, 8
        %s212 = scalar_lea.vmem %s0, %s211
        %s213 = smul.u32 16, %s21
      $region16: #{tpu_custom_call.1} parent=11 // pred_fallthru
        _
      // Predicated region
      $region17: #{tpu_custom_call.1} parent=11 // pred_check
        %p214 = pneg %p112
      $region18: #{tpu_custom_call.1} parent=11 // pred_check_branch
        %216 = sbr.rel (%p214) target = $region20
      $region19: #{tpu_custom_call.1} parent=11 // pred_region
        %s217 = smul.u32 16, %s21
        %p218 = scmp.lt.s32.totalorder %s217, 15
        %s219 = scalar_select %p218, %s217, 15
        %s220 = smul.addr %s219, 8
        %s221 = scalar_lea.vmem %s2, %s220
        %s222 = smul.u32 16, %s21
      $region20: #{tpu_custom_call.1} parent=11 // pred_fallthru
        _
      // Predicated region
      $region21: #{tpu_custom_call.1} parent=11 // pred_check
        %p223 = pneg %p138
      $region22: #{tpu_custom_call.1} parent=11 // pred_check_branch
        %225 = sbr.rel (%p223) target = $region24
      $region23: #{tpu_custom_call.1} parent=11 // pred_region
        %p226 = scmp.lt.s32.totalorder %s23, 0
        %s227 = scalar_select %p226, %s23, 0
        %s228 = scalar_lea.vmem %s3, %s227
      $region24: #{tpu_custom_call.1} parent=11 // pred_fallthru
        _
      // Predicated region
      $region25: #{tpu_custom_call.1} parent=11 // pred_check
        %p229 = pneg %p164
      $region26: #{tpu_custom_call.1} parent=11 // pred_check_branch
        %231 = sbr.rel (%p229) target = $region28
      $region27: #{tpu_custom_call.1} parent=11 // pred_region
        %s232 = smul.u32 16, %s21
        %p233 = scmp.lt.s32.totalorder %s232, 15
        %s234 = scalar_select %p233, %s232, 15
        %s235 = smul.addr %s234, 8
        %s236 = scalar_lea.vmem %s4, %s235
        %s237 = smul.u32 16, %s21
      $region28: #{tpu_custom_call.1} parent=11 // pred_fallthru
        _
    $region12: #{tpu_custom_call.1} parent=5 // pred_fallthru
      _
    %p238 = scmp.lt.s32.totalorder %s11, 2
    // Predicated region
    $region29: #{tpu_custom_call.1} parent=5 // pred_check
      %p239 = pneg %p238
    $region30: #{tpu_custom_call.1} parent=5 // pred_check_branch
      %241 = sbr.rel (%p239) target = $region32
    $region31: #{tpu_custom_call.1} parent=5 // pred_region
      // Predicated region
      $region33: #{tpu_custom_call.1} parent=31 // pred_check
        %p242 = pneg %p80
      $region34: #{tpu_custom_call.1} parent=31 // pred_check_branch
        %244 = sbr.rel (%p242) target = $region36
      $region35: #{tpu_custom_call.1} parent=31 // pred_region
        %s245 = ssub.s32 1, %s19
        %s246 = smul.u32 %s20, %s245
        %s247 = smul.u32 16, %s246
        %p248 = scmp.lt.s32.totalorder %s247, 15
        %s249 = scalar_select %p248, %s247, 15
        %s250 = smul.addr %s249, 8
        %s251 = scalar_lea.vmem %s1, %s250
        %s252 = ssub.s32 1, %s19
        %s253 = smul.u32 %s20, %s252
        %s254 = smul.u32 16, %s253
      $region36: #{tpu_custom_call.1} parent=31 // pred_fallthru
        _
    $region32: #{tpu_custom_call.1} parent=5 // pred_fallthru
      _
    %p255 = scmp.le.s32.totalorder 1, %s11
    %p256 = scmp.lt.s32.totalorder %s11, 3
    %p257 = pnand %p255, %p256
    %p258 = pneg %p257
    // Predicated region
    $region37: #{tpu_custom_call.1} parent=5 // pred_check
      _
    $region38: #{tpu_custom_call.1} parent=5 // pred_check_branch
      %260 = sbr.rel (%p257) target = $region40
    $region39: #{tpu_custom_call.1} parent=5 // pred_region
      %s261 = ssub.s32 %s11, 1
      %s262 = smul.u32 16, %s21
      %p263 = scmp.lt.s32.totalorder %s262, 15
      %s264 = scalar_select %p263, %s262, 15
      %s265 = smul.addr %s264, 8
      %s266 = scalar_lea.vmem %s0, %s265
      %p267 = pneg %p56
      %p268 = pneg %p53
      %s269 = ssub.s32 1, %s22
      %s270 = smul.u32 %s23, %s269
      %s271 = smul.u32 16, %s270
      %p272 = scmp.lt.s32.totalorder %s271, 15
      %s273 = scalar_select %p272, %s271, 15
      %s274 = smul.addr %s273, 8
      %s275 = scalar_lea.vmem %s1, %s274
      %p276 = pneg %p86
      %p277 = pneg %p83
      %s278 = smul.u32 16, %s21
      %p279 = scmp.lt.s32.totalorder %s278, 15
      %s280 = scalar_select %p279, %s278, 15
      %s281 = smul.addr %s280, 8
      %s282 = scalar_lea.vmem %s2, %s281
      %p283 = pneg %p112
      %p284 = pneg %p109
      %p285 = scmp.lt.s32.totalorder %s23, 0
      %s286 = scalar_select %p285, %s23, 0
      %s287 = scalar_lea.vmem %s3, %s286
      %p288 = pneg %p138
      %p289 = pneg %p135
      %s290 = smul.u32 16, %s21
      %p291 = scmp.lt.s32.totalorder %s290, 15
      %s292 = scalar_select %p291, %s290, 15
      %s293 = smul.addr %s292, 8
      %s294 = scalar_lea.vmem %s4, %s293
      %p295 = pneg %p164
      %p296 = pneg %p161
      %p297 = pneg %p190
      %p298 = pneg %p187
      %s299 = smul.u32 16, %s21
      %p300 = scmp.lt.s32.totalorder %s299, 15
      %s301 = scalar_select %p300, %s299, 15
      %s302 = smul.addr %s301, 8
      %s303 = scalar_lea.vmem %s5, %s302
      %s304 = smul.u32 16, %s21
      %p305 = scmp.lt.s32.totalorder %s304, 15
      %s306 = scalar_select %p305, %s304, 15
      %s307 = smul.addr %s306, 8
      %s308 = scalar_lea.vmem %s0, %s307
      %s309 = smul.u32 16, %s21
      %s310 = ssub.s32 1, %s22
      %s311 = smul.u32 %s23, %s310
      %s312 = smul.u32 16, %s311
      %p313 = scmp.lt.s32.totalorder %s312, 15
      %s314 = scalar_select %p313, %s312, 15
      %s315 = smul.addr %s314, 8
      %s316 = scalar_lea.vmem %s1, %s315
      %s317 = ssub.s32 1, %s22
      %s318 = smul.u32 %s23, %s317
      %s319 = smul.u32 16, %s318
      %s320 = smul.u32 16, %s21
      %p321 = scmp.lt.s32.totalorder %s320, 15
      %s322 = scalar_select %p321, %s320, 15
      %s323 = smul.addr %s322, 8
      %s324 = scalar_lea.vmem %s2, %s323
      %s325 = smul.u32 16, %s21
      %p326 = scmp.lt.s32.totalorder %s23, 0
      %s327 = scalar_select %p326, %s23, 0
      %s328 = scalar_lea.vmem %s3, %s327
      %s329 = smul.u32 16, %s21
      %p330 = scmp.lt.s32.totalorder %s329, 15
      %s331 = scalar_select %p330, %s329, 15
      %s332 = smul.addr %s331, 8
      %s333 = scalar_lea.vmem %s4, %s332
      %s334 = smul.u32 16, %s21
      %s335 = smul.u32 16, %s21
      %p336 = scmp.lt.s32.totalorder %s335, 15
      %s337 = scalar_select %p336, %s335, 15
      %s338 = smul.addr %s337, 8
      %s339 = scalar_lea.vmem %s5, %s338
      %s340 = smul.u32 16, %s21
      %p341 = scmp.eq.s32.totalorder %s22, 0
      // Predicated region
      $region41: #{tpu_custom_call.1} parent=39 // pred_check
        %p342 = pneg %p341
      $region42: #{tpu_custom_call.1} parent=39 // pred_check_branch
        %344 = sbr.rel (%p342) target = $region44
      $region43: #{tpu_custom_call.1} parent=39 // pred_region
        %v345 = vld [vmem:[%s308] sm:$0xff]
        %v346 = vld [vmem:[%s308 + $0x8] sm:$0xff]
        %v347 = vld [vmem:[%s308 + $0x10] sm:$0xff]
        %v348 = vld [vmem:[%s308 + $0x18] sm:$0xff]
        %v349 = vld [vmem:[%s308 + $0x20] sm:$0xff]
        %v350 = vld [vmem:[%s308 + $0x28] sm:$0xff]
        %v351 = vld [vmem:[%s308 + $0x30] sm:$0xff]
        %v352 = vld [vmem:[%s308 + $0x38] sm:$0xff]
        %v353 = vld [vmem:[%s308 + $0x40] sm:$0xff]
        %v354 = vld [vmem:[%s308 + $0x48] sm:$0xff]
        %v355 = vld [vmem:[%s308 + $0x50] sm:$0xff]
        %v356 = vld [vmem:[%s308 + $0x58] sm:$0xff]
        %v357 = vld [vmem:[%s308 + $0x60] sm:$0xff]
        %v358 = vld [vmem:[%s308 + $0x68] sm:$0xff]
        %v359 = vld [vmem:[%s308 + $0x70] sm:$0xff]
        %v360 = vld [vmem:[%s308 + $0x78] sm:$0xff]
        %v361 = vld [vmem:[%s316] sm:$0xff]
        %v362 = vld [vmem:[%s316 + $0x8] sm:$0xff]
        %v363 = vld [vmem:[%s316 + $0x10] sm:$0xff]
        %v364 = vld [vmem:[%s316 + $0x18] sm:$0xff]
        %v365 = vld [vmem:[%s316 + $0x20] sm:$0xff]
        %v366 = vld [vmem:[%s316 + $0x28] sm:$0xff]
        %v367 = vld [vmem:[%s316 + $0x30] sm:$0xff]
        %v368 = vld [vmem:[%s316 + $0x38] sm:$0xff]
        %v369 = vld [vmem:[%s316 + $0x40] sm:$0xff]
        %v370 = vld [vmem:[%s316 + $0x48] sm:$0xff]
        %v371 = vld [vmem:[%s316 + $0x50] sm:$0xff]
        %v372 = vld [vmem:[%s316 + $0x58] sm:$0xff]
        %v373 = vld [vmem:[%s316 + $0x60] sm:$0xff]
        %v374 = vld [vmem:[%s316 + $0x68] sm:$0xff]
        %v375 = vld [vmem:[%s316 + $0x70] sm:$0xff]
        %v376 = vld [vmem:[%s316 + $0x78] sm:$0xff]
        %377 = vmatprep.subr.mxu0 0.0
        %378 = vmatpush1.xpose.msra.mxu0 %v361
        %379 = vmatprep.subr.mxu0 0.0
        %380 = vmatpush1.xpose.msra.mxu0 %v362
        %381 = vmatprep.subr.mxu0 0.0
        %382 = vmatpush1.xpose.msra.mxu0 %v363
        %383 = vmatprep.subr.mxu0 0.0
        %384 = vmatpush1.xpose.msra.mxu0 %v364
        %385 = vmatprep.subr.mxu0 0.0
        %386 = vmatpush1.xpose.msra.mxu0 %v365
        %387 = vmatprep.subr.mxu0 0.0
        %388 = vmatpush1.xpose.msra.mxu0 %v366
        %389 = vmatprep.subr.mxu0 0.0
        %390 = vmatpush1.xpose.msra.mxu0 %v367
        %391 = vmatprep.subr.mxu0 0.0
        %392 = vmatpush1.xpose.msra.mxu0 %v368
        %393 = vmatprep.subr.mxu0 0.0
        %394 = vmatpush1.xpose.msra.mxu0 %v369
        %395 = vmatprep.subr.mxu0 0.0
        %396 = vmatpush1.xpose.msra.mxu0 %v370
        %397 = vmatprep.subr.mxu0 0.0
        %398 = vmatpush1.xpose.msra.mxu0 %v371
        %399 = vmatprep.subr.mxu0 0.0
        %400 = vmatpush1.xpose.msra.mxu0 %v372
        %401 = vmatprep.subr.mxu0 0.0
        %402 = vmatpush1.xpose.msra.mxu0 %v373
        %403 = vmatprep.subr.mxu0 0.0
        %404 = vmatpush1.xpose.msra.mxu0 %v374
        %405 = vmatprep.subr.mxu0 0.0
        %406 = vmatpush1.xpose.msra.mxu0 %v375
        %407 = vmatprep.subr.mxu0 0.0
        %408 = vmatpush1.xpose.msra.mxu0 %v376
        %409 = vmatprep.subr.mxu0 0.0
        %410 = vmatpush1.xpose.msra.mxu0 0.0
        %411 = vmatprep.subr.mxu0 0.0
        %412 = vmatpush1.xpose.msra.mxu0 0.0
        %413 = vmatprep.subr.mxu0 0.0
        %414 = vmatpush1.xpose.msra.mxu0 0.0
        %415 = vmatprep.subr.mxu0 0.0
        %416 = vmatpush1.xpose.msra.mxu0 0.0
        %417 = vmatprep.subr.mxu0 0.0
        %418 = vmatpush1.xpose.msra.mxu0 0.0
        %419 = vmatprep.subr.mxu0 0.0
        %420 = vmatpush1.xpose.msra.mxu0 0.0
        %421 = vmatprep.subr.mxu0 0.0
        %422 = vmatpush1.xpose.msra.mxu0 0.0
        %423 = vmatprep.subr.mxu0 0.0
        %424 = vmatpush1.xpose.msra.mxu0 0.0
        %425 = vmatprep.subr.mxu0 0.0
        %426 = vmatpush1.xpose.msra.mxu0 0.0
        %427 = vmatprep.subr.mxu0 0.0
        %428 = vmatpush1.xpose.msra.mxu0 0.0
        %429 = vmatprep.subr.mxu0 0.0
        %430 = vmatpush1.xpose.msra.mxu0 0.0
        %431 = vmatprep.subr.mxu0 0.0
        %432 = vmatpush1.xpose.msra.mxu0 0.0
        %433 = vmatprep.subr.mxu0 0.0
        %434 = vmatpush1.xpose.msra.mxu0 0.0
        %435 = vmatprep.subr.mxu0 0.0
        %436 = vmatpush1.xpose.msra.mxu0 0.0
        %437 = vmatprep.subr.mxu0 0.0
        %438 = vmatpush1.xpose.msra.mxu0 0.0
        %439 = vmatprep.subr.mxu0 0.0
        %440 = vmatpush1.xpose.msra.mxu0 0.0
        %441 = vmatprep.mubr.f32.mxu0 0.0
        %442 = vmatmul.mubr.f32.gmra.mrb[0].mxu0 %v345
        %v443 = vpop.f32.mrb[0].mxu0
        %v444 = vadd.f32 0.0, %v443
        %v445 = vpop.f32.mrb[0].mxu0
        %446 = vmatprep.mubr.f32.mxu0 0.0
        %447 = vmatmul.mubr.f32.gmra.mrb[0].mxu0 %v346
        %v448 = vpop.f32.mrb[0].mxu0
        %v449 = vadd.f32 0.0, %v448
        %v450 = vpop.f32.mrb[0].mxu0
        %451 = vmatprep.mubr.f32.mxu0 0.0
        %452 = vmatmul.mubr.f32.gmra.mrb[0].mxu0 %v347
        %v453 = vpop.f32.mrb[0].mxu0
        %v454 = vadd.f32 0.0, %v453
        %v455 = vpop.f32.mrb[0].mxu0
        %456 = vmatprep.mubr.f32.mxu0 0.0
        %457 = vmatmul.mubr.f32.gmra.mrb[0].mxu0 %v348
        %v458 = vpop.f32.mrb[0].mxu0
        %v459 = vadd.f32 0.0, %v458
        %v460 = vpop.f32.mrb[0].mxu0
        %461 = vmatprep.mubr.f32.mxu0 0.0
        %462 = vmatmul.mubr.f32.gmra.mrb[0].mxu0 %v349
        %v463 = vpop.f32.mrb[0].mxu0
        %v464 = vadd.f32 0.0, %v463
        %v465 = vpop.f32.mrb[0].mxu0
        %466 = vmatprep.mubr.f32.mxu0 0.0
        %467 = vmatmul.mubr.f32.gmra.mrb[0].mxu0 %v350
        %v468 = vpop.f32.mrb[0].mxu0
        %v469 = vadd.f32 0.0, %v468
        %v470 = vpop.f32.mrb[0].mxu0
        %471 = vmatprep.mubr.f32.mxu0 0.0
        %472 = vmatmul.mubr.f32.gmra.mrb[0].mxu0 %v351
        %v473 = vpop.f32.mrb[0].mxu0
        %v474 = vadd.f32 0.0, %v473
        %v475 = vpop.f32.mrb[0].mxu0
        %476 = vmatprep.mubr.f32.mxu0 0.0
        %477 = vmatmul.mubr.f32.gmra.mrb[0].mxu0 %v352
        %v478 = vpop.f32.mrb[0].mxu0
        %v479 = vadd.f32 0.0, %v478
        %v480 = vpop.f32.mrb[0].mxu0
        %481 = vmatprep.mubr.f32.mxu0 0.0
        %482 = vmatmul.mubr.f32.gmra.mrb[0].mxu0 %v353
        %v483 = vpop.f32.mrb[0].mxu0
        %v484 = vadd.f32 0.0, %v483
        %v485 = vpop.f32.mrb[0].mxu0
        %486 = vmatprep.mubr.f32.mxu0 0.0
        %487 = vmatmul.mubr.f32.gmra.mrb[0].mxu0 %v354
        %v488 = vpop.f32.mrb[0].mxu0
        %v489 = vadd.f32 0.0, %v488
        %v490 = vpop.f32.mrb[0].mxu0
        %491 = vmatprep.mubr.f32.mxu0 0.0
        %492 = vmatmul.mubr.f32.gmra.mrb[0].mxu0 %v355
        %v493 = vpop.f32.mrb[0].mxu0
        %v494 = vadd.f32 0.0, %v493
        %v495 = vpop.f32.mrb[0].mxu0
        %496 = vmatprep.mubr.f32.mxu0 0.0
        %497 = vmatmul.mubr.f32.gmra.mrb[0].mxu0 %v356
        %v498 = vpop.f32.mrb[0].mxu0
        %v499 = vadd.f32 0.0, %v498
        %v500 = vpop.f32.mrb[0].mxu0
        %501 = vmatprep.mubr.f32.mxu0 0.0
        %502 = vmatmul.mubr.f32.gmra.mrb[0].mxu0 %v357
        %v503 = vpop.f32.mrb[0].mxu0
        %v504 = vadd.f32 0.0, %v503
        %v505 = vpop.f32.mrb[0].mxu0
        %506 = vmatprep.mubr.f32.mxu0 0.0
        %507 = vmatmul.mubr.f32.gmra.mrb[0].mxu0 %v358
        %v508 = vpop.f32.mrb[0].mxu0
        %v509 = vadd.f32 0.0, %v508
        %v510 = vpop.f32.mrb[0].mxu0
        %511 = vmatprep.mubr.f32.mxu0 0.0
        %512 = vmatmul.mubr.f32.gmra.mrb[0].mxu0 %v359
        %v513 = vpop.f32.mrb[0].mxu0
        %v514 = vadd.f32 0.0, %v513
        %v515 = vpop.f32.mrb[0].mxu0
        %516 = vmatprep.mubr.f32.mxu0 0.0
        %517 = vmatmul.mubr.f32.gmra.mrb[0].mxu0 %v360
        %v518 = vpop.f32.mrb[0].mxu0
        %v519 = vadd.f32 0.0, %v518
        %v520 = vpop.f32.mrb[0].mxu0
        %521 = vdwg.mxu0
        %v522 = vmul.f32 %v444, 14.285714
        %v523 = vmul.f32 %v449, 14.285714
        %v524 = vmul.f32 %v454, 14.285714
        %v525 = vmul.f32 %v459, 14.285714
        %v526 = vmul.f32 %v464, 14.285714
        %v527 = vmul.f32 %v469, 14.285714
        %v528 = vmul.f32 %v474, 14.285714
        %v529 = vmul.f32 %v479, 14.285714
        %v530 = vmul.f32 %v484, 14.285714
        %v531 = vmul.f32 %v489, 14.285714
        %v532 = vmul.f32 %v494, 14.285714
        %v533 = vmul.f32 %v499, 14.285714
        %v534 = vmul.f32 %v504, 14.285714
        %v535 = vmul.f32 %v509, 14.285714
        %v536 = vmul.f32 %v514, 14.285714
        %v537 = vmul.f32 %v519, 14.285714
        %s538 = smul.u32 %s23, 128
        %s539 = scalar_lea.vmem [#allocation2], %s538
        %540 = vst [vmem:[%s539] sm:$0xff] %v522
        %541 = vst [vmem:[%s539 + $0x8] sm:$0xff] %v523
        %542 = vst [vmem:[%s539 + $0x10] sm:$0xff] %v524
        %543 = vst [vmem:[%s539 + $0x18] sm:$0xff] %v525
        %544 = vst [vmem:[%s539 + $0x20] sm:$0xff] %v526
        %545 = vst [vmem:[%s539 + $0x28] sm:$0xff] %v527
        %546 = vst [vmem:[%s539 + $0x30] sm:$0xff] %v528
        %547 = vst [vmem:[%s539 + $0x38] sm:$0xff] %v529
        %548 = vst [vmem:[%s539 + $0x40] sm:$0xff] %v530
        %549 = vst [vmem:[%s539 + $0x48] sm:$0xff] %v531
        %550 = vst [vmem:[%s539 + $0x50] sm:$0xff] %v532
        %551 = vst [vmem:[%s539 + $0x58] sm:$0xff] %v533
        %552 = vst [vmem:[%s539 + $0x60] sm:$0xff] %v534
        %553 = vst [vmem:[%s539 + $0x68] sm:$0xff] %v535
        %554 = vst [vmem:[%s539 + $0x70] sm:$0xff] %v536
        %555 = vst [vmem:[%s539 + $0x78] sm:$0xff] %v537
        %v556 = vlaneseq
        %v557 = vand.u32 %v556, 127
        %v558 = vstv %s538
        %v559 = vadd.s32 %v558, %v557
        %vm560 = vcmp.lt.s32.totalorder %v559, 8
        %v561 = vsel %vm560, %v522, -inf
        %v562 = vsel %vm560, %v523, -inf
        %v563 = vsel %vm560, %v524, -inf
        %v564 = vsel %vm560, %v525, -inf
        %v565 = vsel %vm560, %v526, -inf
        %v566 = vsel %vm560, %v527, -inf
        %v567 = vsel %vm560, %v528, -inf
        %v568 = vsel %vm560, %v529, -inf
        %v569 = vsel %vm560, %v530, -inf
        %v570 = vsel %vm560, %v531, -inf
        %v571 = vsel %vm560, %v532, -inf
        %v572 = vsel %vm560, %v533, -inf
        %v573 = vsel %vm560, %v534, -inf
        %v574 = vsel %vm560, %v535, -inf
        %v575 = vsel %vm560, %v536, -inf
        %v576 = vsel %vm560, %v537, -inf
        %p577 = scmp.eq.s32.totalorder %s23, 0
        // Predicated region
        $region45: #{tpu_custom_call.1} parent=43 // pred_check
          %p578 = pneg %p577
        $region46: #{tpu_custom_call.1} parent=43 // pred_check_branch
          %580 = sbr.rel (%p578) target = $region48
        $region47: #{tpu_custom_call.1} parent=43 // pred_region
          %581 = vst [vmem:[#allocation3] sm:$0xff] -inf
          %582 = vst [vmem:[#allocation3 + $0x8] sm:$0xff] -inf
          %583 = vst [vmem:[#allocation3 + $0x10] sm:$0xff] -inf
          %584 = vst [vmem:[#allocation3 + $0x18] sm:$0xff] -inf
          %585 = vst [vmem:[#allocation3 + $0x20] sm:$0xff] -inf
          %586 = vst [vmem:[#allocation3 + $0x28] sm:$0xff] -inf
          %587 = vst [vmem:[#allocation3 + $0x30] sm:$0xff] -inf
          %588 = vst [vmem:[#allocation3 + $0x38] sm:$0xff] -inf
          %589 = vst [vmem:[#allocation3 + $0x40] sm:$0xff] -inf
          %590 = vst [vmem:[#allocation3 + $0x48] sm:$0xff] -inf
          %591 = vst [vmem:[#allocation3 + $0x50] sm:$0xff] -inf
          %592 = vst [vmem:[#allocation3 + $0x58] sm:$0xff] -inf
          %593 = vst [vmem:[#allocation3 + $0x60] sm:$0xff] -inf
          %594 = vst [vmem:[#allocation3 + $0x68] sm:$0xff] -inf
          %595 = vst [vmem:[#allocation3 + $0x70] sm:$0xff] -inf
          %596 = vst [vmem:[#allocation3 + $0x78] sm:$0xff] -inf
        $region48: #{tpu_custom_call.1} parent=43 // pred_fallthru
          _
        %v597 = vld [vmem:[#allocation3] sm:$0xff]
        %v598 = vld [vmem:[#allocation3 + $0x8] sm:$0xff]
        %v599 = vld [vmem:[#allocation3 + $0x10] sm:$0xff]
        %v600 = vld [vmem:[#allocation3 + $0x18] sm:$0xff]
        %v601 = vld [vmem:[#allocation3 + $0x20] sm:$0xff]
        %v602 = vld [vmem:[#allocation3 + $0x28] sm:$0xff]
        %v603 = vld [vmem:[#allocation3 + $0x30] sm:$0xff]
        %v604 = vld [vmem:[#allocation3 + $0x38] sm:$0xff]
        %v605 = vld [vmem:[#allocation3 + $0x40] sm:$0xff]
        %v606 = vld [vmem:[#allocation3 + $0x48] sm:$0xff]
        %v607 = vld [vmem:[#allocation3 + $0x50] sm:$0xff]
        %v608 = vld [vmem:[#allocation3 + $0x58] sm:$0xff]
        %v609 = vld [vmem:[#allocation3 + $0x60] sm:$0xff]
        %v610 = vld [vmem:[#allocation3 + $0x68] sm:$0xff]
        %v611 = vld [vmem:[#allocation3 + $0x70] sm:$0xff]
        %v612 = vld [vmem:[#allocation3 + $0x78] sm:$0xff]
        %v613 = vmax.f32 %v597, %v561
        %v614 = vmax.f32 %v598, %v562
        %v615 = vmax.f32 %v599, %v563
        %v616 = vmax.f32 %v600, %v564
        %v617 = vmax.f32 %v601, %v565
        %v618 = vmax.f32 %v602, %v566
        %v619 = vmax.f32 %v603, %v567
        %v620 = vmax.f32 %v604, %v568
        %v621 = vmax.f32 %v605, %v569
        %v622 = vmax.f32 %v606, %v570
        %v623 = vmax.f32 %v607, %v571
        %v624 = vmax.f32 %v608, %v572
        %v625 = vmax.f32 %v609, %v573
        %v626 = vmax.f32 %v610, %v574
        %v627 = vmax.f32 %v611, %v575
        %v628 = vmax.f32 %v612, %v576
        %629 = vst [vmem:[#allocation3] sm:$0xff] %v613
        %630 = vst [vmem:[#allocation3 + $0x8] sm:$0xff] %v614
        %631 = vst [vmem:[#allocation3 + $0x10] sm:$0xff] %v615
        %632 = vst [vmem:[#allocation3 + $0x18] sm:$0xff] %v616
        %633 = vst [vmem:[#allocation3 + $0x20] sm:$0xff] %v617
        %634 = vst [vmem:[#allocation3 + $0x28] sm:$0xff] %v618
        %635 = vst [vmem:[#allocation3 + $0x30] sm:$0xff] %v619
        %636 = vst [vmem:[#allocation3 + $0x38] sm:$0xff] %v620
        %637 = vst [vmem:[#allocation3 + $0x40] sm:$0xff] %v621
        %638 = vst [vmem:[#allocation3 + $0x48] sm:$0xff] %v622
        %639 = vst [vmem:[#allocation3 + $0x50] sm:$0xff] %v623
        %640 = vst [vmem:[#allocation3 + $0x58] sm:$0xff] %v624
        %641 = vst [vmem:[#allocation3 + $0x60] sm:$0xff] %v625
        %642 = vst [vmem:[#allocation3 + $0x68] sm:$0xff] %v626
        %643 = vst [vmem:[#allocation3 + $0x70] sm:$0xff] %v627
        %644 = vst [vmem:[#allocation3 + $0x78] sm:$0xff] %v628
      $region44: #{tpu_custom_call.1} parent=39 // pred_fallthru
        _
      %p645 = scmp.eq.s32.totalorder %s22, 1
      // Predicated region
      $region49: #{tpu_custom_call.1} parent=39 // pred_check
        %p646 = pneg %p645
      $region50: #{tpu_custom_call.1} parent=39 // pred_check_branch
        %648 = sbr.rel (%p646) target = $region52
      $region51: #{tpu_custom_call.1} parent=39 // pred_region
        %p649 = scmp.eq.s32.totalorder %s23, 0
        // Predicated region
        $region53: #{tpu_custom_call.1} parent=51 // pred_check
          %p650 = pneg %p649
        $region54: #{tpu_custom_call.1} parent=51 // pred_check_branch
          %652 = sbr.rel (%p650) target = $region56
        $region55: #{tpu_custom_call.1} parent=51 // pred_region
          %v653 = vld [vmem:[#allocation3] sm:$0xff]
          %v654 = vld [vmem:[#allocation3 + $0x8] sm:$0xff]
          %v655 = vld [vmem:[#allocation3 + $0x10] sm:$0xff]
          %v656 = vld [vmem:[#allocation3 + $0x18] sm:$0xff]
          %v657 = vld [vmem:[#allocation3 + $0x20] sm:$0xff]
          %v658 = vld [vmem:[#allocation3 + $0x28] sm:$0xff]
          %v659 = vld [vmem:[#allocation3 + $0x30] sm:$0xff]
          %v660 = vld [vmem:[#allocation3 + $0x38] sm:$0xff]
          %v661 = vld [vmem:[#allocation3 + $0x40] sm:$0xff]
          %v662 = vld [vmem:[#allocation3 + $0x48] sm:$0xff]
          %v663 = vld [vmem:[#allocation3 + $0x50] sm:$0xff]
          %v664 = vld [vmem:[#allocation3 + $0x58] sm:$0xff]
          %v665 = vld [vmem:[#allocation3 + $0x60] sm:$0xff]
          %v666 = vld [vmem:[#allocation3 + $0x68] sm:$0xff]
          %v667 = vld [vmem:[#allocation3 + $0x70] sm:$0xff]
          %v668 = vld [vmem:[#allocation3 + $0x78] sm:$0xff]
          %669 = vmax.xlane.f32.xlu0 %v653
          %v670 = vpop.xlane.xlu0 %669
          %671 = vmax.xlane.f32.xlu0 %v654
          %v672 = vpop.xlane.xlu0 %671
          %673 = vmax.xlane.f32.xlu0 %v655
          %v674 = vpop.xlane.xlu0 %673
          %675 = vmax.xlane.f32.xlu0 %v656
          %v676 = vpop.xlane.xlu0 %675
          %677 = vmax.xlane.f32.xlu0 %v657
          %v678 = vpop.xlane.xlu0 %677
          %679 = vmax.xlane.f32.xlu0 %v658
          %v680 = vpop.xlane.xlu0 %679
          %681 = vmax.xlane.f32.xlu0 %v659
          %v682 = vpop.xlane.xlu0 %681
          %683 = vmax.xlane.f32.xlu0 %v660
          %v684 = vpop.xlane.xlu0 %683
          %685 = vmax.xlane.f32.xlu0 %v661
          %v686 = vpop.xlane.xlu0 %685
          %687 = vmax.xlane.f32.xlu0 %v662
          %v688 = vpop.xlane.xlu0 %687
          %689 = vmax.xlane.f32.xlu0 %v663
          %v690 = vpop.xlane.xlu0 %689
          %691 = vmax.xlane.f32.xlu0 %v664
          %v692 = vpop.xlane.xlu0 %691
          %693 = vmax.xlane.f32.xlu0 %v665
          %v694 = vpop.xlane.xlu0 %693
          %695 = vmax.xlane.f32.xlu0 %v666
          %v696 = vpop.xlane.xlu0 %695
          %697 = vmax.xlane.f32.xlu0 %v667
          %v698 = vpop.xlane.xlu0 %697
          %699 = vmax.xlane.f32.xlu0 %v668
          %v700 = vpop.xlane.xlu0 %699
          %vm701 = vcmask 7168
          %702 = vst.msk [vmem:[#allocation4] sm:$0xff] %vm701, %v670
          %703 = vst.msk [vmem:[#allocation4 + $0x8] sm:$0xff] %vm701, %v672
          %704 = vst.msk [vmem:[#allocation4 + $0x10] sm:$0xff] %vm701, %v674
          %705 = vst.msk [vmem:[#allocation4 + $0x18] sm:$0xff] %vm701, %v676
          %706 = vst.msk [vmem:[#allocation4 + $0x20] sm:$0xff] %vm701, %v678
          %707 = vst.msk [vmem:[#allocation4 + $0x28] sm:$0xff] %vm701, %v680
          %708 = vst.msk [vmem:[#allocation4 + $0x30] sm:$0xff] %vm701, %v682
          %709 = vst.msk [vmem:[#allocation4 + $0x38] sm:$0xff] %vm701, %v684
          %710 = vst.msk [vmem:[#allocation4 + $0x40] sm:$0xff] %vm701, %v686
          %711 = vst.msk [vmem:[#allocation4 + $0x48] sm:$0xff] %vm701, %v688
          %712 = vst.msk [vmem:[#allocation4 + $0x50] sm:$0xff] %vm701, %v690
          %713 = vst.msk [vmem:[#allocation4 + $0x58] sm:$0xff] %vm701, %v692
          %714 = vst.msk [vmem:[#allocation4 + $0x60] sm:$0xff] %vm701, %v694
          %715 = vst.msk [vmem:[#allocation4 + $0x68] sm:$0xff] %vm701, %v696
          %716 = vst.msk [vmem:[#allocation4 + $0x70] sm:$0xff] %vm701, %v698
          %717 = vst.msk [vmem:[#allocation4 + $0x78] sm:$0xff] %vm701, %v700
          %718 = vst [vmem:[#allocation5] sm:$0xff] 0.0
          %719 = vst [vmem:[#allocation5 + $0x8] sm:$0xff] 0.0
          %720 = vst [vmem:[#allocation5 + $0x10] sm:$0xff] 0.0
          %721 = vst [vmem:[#allocation5 + $0x18] sm:$0xff] 0.0
          %722 = vst [vmem:[#allocation5 + $0x20] sm:$0xff] 0.0
          %723 = vst [vmem:[#allocation5 + $0x28] sm:$0xff] 0.0
          %724 = vst [vmem:[#allocation5 + $0x30] sm:$0xff] 0.0
          %725 = vst [vmem:[#allocation5 + $0x38] sm:$0xff] 0.0
          %726 = vst [vmem:[#allocation5 + $0x40] sm:$0xff] 0.0
          %727 = vst [vmem:[#allocation5 + $0x48] sm:$0xff] 0.0
          %728 = vst [vmem:[#allocation5 + $0x50] sm:$0xff] 0.0
          %729 = vst [vmem:[#allocation5 + $0x58] sm:$0xff] 0.0
          %730 = vst [vmem:[#allocation5 + $0x60] sm:$0xff] 0.0
          %731 = vst [vmem:[#allocation5 + $0x68] sm:$0xff] 0.0
          %732 = vst [vmem:[#allocation5 + $0x70] sm:$0xff] 0.0
          %733 = vst [vmem:[#allocation5 + $0x78] sm:$0xff] 0.0
          %734 = vst [vmem:[#allocation6] sm:$0xff] 0.0
          %735 = vst [vmem:[#allocation6 + $0x8] sm:$0xff] 0.0
          %736 = vst [vmem:[#allocation6 + $0x10] sm:$0xff] 0.0
          %737 = vst [vmem:[#allocation6 + $0x18] sm:$0xff] 0.0
          %738 = vst [vmem:[#allocation6 + $0x20] sm:$0xff] 0.0
          %739 = vst [vmem:[#allocation6 + $0x28] sm:$0xff] 0.0
          %740 = vst [vmem:[#allocation6 + $0x30] sm:$0xff] 0.0
          %741 = vst [vmem:[#allocation6 + $0x38] sm:$0xff] 0.0
          %742 = vst [vmem:[#allocation6 + $0x40] sm:$0xff] 0.0
          %743 = vst [vmem:[#allocation6 + $0x48] sm:$0xff] 0.0
          %744 = vst [vmem:[#allocation6 + $0x50] sm:$0xff] 0.0
          %745 = vst [vmem:[#allocation6 + $0x58] sm:$0xff] 0.0
          %746 = vst [vmem:[#allocation6 + $0x60] sm:$0xff] 0.0
          %747 = vst [vmem:[#allocation6 + $0x68] sm:$0xff] 0.0
          %748 = vst [vmem:[#allocation6 + $0x70] sm:$0xff] 0.0
          %749 = vst [vmem:[#allocation6 + $0x78] sm:$0xff] 0.0
        $region56: #{tpu_custom_call.1} parent=51 // pred_fallthru
          _
        %s750 = smul.u32 %s23, 128
        %s751 = scalar_lea.vmem [#allocation2], %s750
        %v752 = vld [vmem:[%s751] sm:$0xff]
        %v753 = vld [vmem:[%s751 + $0x8] sm:$0xff]
        %v754 = vld [vmem:[%s751 + $0x10] sm:$0xff]
        %v755 = vld [vmem:[%s751 + $0x18] sm:$0xff]
        %v756 = vld [vmem:[%s751 + $0x20] sm:$0xff]
        %v757 = vld [vmem:[%s751 + $0x28] sm:$0xff]
        %v758 = vld [vmem:[%s751 + $0x30] sm:$0xff]
        %v759 = vld [vmem:[%s751 + $0x38] sm:$0xff]
        %v760 = vld [vmem:[%s751 + $0x40] sm:$0xff]
        %v761 = vld [vmem:[%s751 + $0x48] sm:$0xff]
        %v762 = vld [vmem:[%s751 + $0x50] sm:$0xff]
        %v763 = vld [vmem:[%s751 + $0x58] sm:$0xff]
        %v764 = vld [vmem:[%s751 + $0x60] sm:$0xff]
        %v765 = vld [vmem:[%s751 + $0x68] sm:$0xff]
        %v766 = vld [vmem:[%s751 + $0x70] sm:$0xff]
        %v767 = vld [vmem:[%s751 + $0x78] sm:$0xff]
        %v768 = vld [vmem:[#allocation4] sm:$0xff]
        %v769 = vld [vmem:[#allocation4 + $0x8] sm:$0xff]
        %v770 = vld [vmem:[#allocation4 + $0x10] sm:$0xff]
        %v771 = vld [vmem:[#allocation4 + $0x18] sm:$0xff]
        %v772 = vld [vmem:[#allocation4 + $0x20] sm:$0xff]
        %v773 = vld [vmem:[#allocation4 + $0x28] sm:$0xff]
        %v774 = vld [vmem:[#allocation4 + $0x30] sm:$0xff]
        %v775 = vld [vmem:[#allocation4 + $0x38] sm:$0xff]
        %v776 = vld [vmem:[#allocation4 + $0x40] sm:$0xff]
        %v777 = vld [vmem:[#allocation4 + $0x48] sm:$0xff]
        %v778 = vld [vmem:[#allocation4 + $0x50] sm:$0xff]
        %v779 = vld [vmem:[#allocation4 + $0x58] sm:$0xff]
        %v780 = vld [vmem:[#allocation4 + $0x60] sm:$0xff]
        %v781 = vld [vmem:[#allocation4 + $0x68] sm:$0xff]
        %v782 = vld [vmem:[#allocation4 + $0x70] sm:$0xff]
        %v783 = vld [vmem:[#allocation4 + $0x78] sm:$0xff]
        %785 = vset.pattern.permute.xlu0 0
        %786 = vperm.xlu0 %785, %v768
        %v787 = vpop.permute.xlu0 %786
        %790 = vset.pattern.permute.xlu0 0
        %791 = vperm.xlu0 %790, %v769
        %v792 = vpop.permute.xlu0 %791
        %795 = vset.pattern.permute.xlu0 0
        %796 = vperm.xlu0 %795, %v770
        %v797 = vpop.permute.xlu0 %796
        %800 = vset.pattern.permute.xlu0 0
        %801 = vperm.xlu0 %800, %v771
        %v802 = vpop.permute.xlu0 %801
        %805 = vset.pattern.permute.xlu0 0
        %806 = vperm.xlu0 %805, %v772
        %v807 = vpop.permute.xlu0 %806
        %810 = vset.pattern.permute.xlu0 0
        %811 = vperm.xlu0 %810, %v773
        %v812 = vpop.permute.xlu0 %811
        %815 = vset.pattern.permute.xlu0 0
        %816 = vperm.xlu0 %815, %v774
        %v817 = vpop.permute.xlu0 %816
        %820 = vset.pattern.permute.xlu0 0
        %821 = vperm.xlu0 %820, %v775
        %v822 = vpop.permute.xlu0 %821
        %825 = vset.pattern.permute.xlu0 0
        %826 = vperm.xlu0 %825, %v776
        %v827 = vpop.permute.xlu0 %826
        %830 = vset.pattern.permute.xlu0 0
        %831 = vperm.xlu0 %830, %v777
        %v832 = vpop.permute.xlu0 %831
        %835 = vset.pattern.permute.xlu0 0
        %836 = vperm.xlu0 %835, %v778
        %v837 = vpop.permute.xlu0 %836
        %840 = vset.pattern.permute.xlu0 0
        %841 = vperm.xlu0 %840, %v779
        %v842 = vpop.permute.xlu0 %841
        %845 = vset.pattern.permute.xlu0 0
        %846 = vperm.xlu0 %845, %v780
        %v847 = vpop.permute.xlu0 %846
        %850 = vset.pattern.permute.xlu0 0
        %851 = vperm.xlu0 %850, %v781
        %v852 = vpop.permute.xlu0 %851
        %855 = vset.pattern.permute.xlu0 0
        %856 = vperm.xlu0 %855, %v782
        %v857 = vpop.permute.xlu0 %856
        %860 = vset.pattern.permute.xlu0 0
        %861 = vperm.xlu0 %860, %v783
        %v862 = vpop.permute.xlu0 %861
        %v864 = vsub.f32 %v752, %v787
        %v865 = vsub.f32 %v753, %v792
        %v866 = vsub.f32 %v754, %v797
        %v867 = vsub.f32 %v755, %v802
        %v868 = vsub.f32 %v756, %v807
        %v869 = vsub.f32 %v757, %v812
        %v870 = vsub.f32 %v758, %v817
        %v871 = vsub.f32 %v759, %v822
        %v872 = vsub.f32 %v760, %v827
        %v873 = vsub.f32 %v761, %v832
        %v874 = vsub.f32 %v762, %v837
        %v875 = vsub.f32 %v763, %v842
        %v876 = vsub.f32 %v764, %v847
        %v877 = vsub.f32 %v765, %v852
        %v878 = vsub.f32 %v766, %v857
        %v879 = vsub.f32 %v767, %v862
        %v880 = vmul.f32 %v864, 1.442695
        %v881 = vpow.pop %v880
        %v882 = vmul.f32 %v865, 1.442695
        %v883 = vpow.pop %v882
        %v884 = vmul.f32 %v866, 1.442695
        %v885 = vpow.pop %v884
        %v886 = vmul.f32 %v867, 1.442695
        %v887 = vpow.pop %v886
        %v888 = vmul.f32 %v868, 1.442695
        %v889 = vpow.pop %v888
        %v890 = vmul.f32 %v869, 1.442695
        %v891 = vpow.pop %v890
        %v892 = vmul.f32 %v870, 1.442695
        %v893 = vpow.pop %v892
        %v894 = vmul.f32 %v871, 1.442695
        %v895 = vpow.pop %v894
        %v896 = vmul.f32 %v872, 1.442695
        %v897 = vpow.pop %v896
        %v898 = vmul.f32 %v873, 1.442695
        %v899 = vpow.pop %v898
        %v900 = vmul.f32 %v874, 1.442695
        %v901 = vpow.pop %v900
        %v902 = vmul.f32 %v875, 1.442695
        %v903 = vpow.pop %v902
        %v904 = vmul.f32 %v876, 1.442695
        %v905 = vpow.pop %v904
        %v906 = vmul.f32 %v877, 1.442695
        %v907 = vpow.pop %v906
        %v908 = vmul.f32 %v878, 1.442695
        %v909 = vpow.pop %v908
        %v910 = vmul.f32 %v879, 1.442695
        %v911 = vpow.pop %v910
        %v912 = vadd.f32 %v881, 1e-05
        %v913 = vadd.f32 %v883, 1e-05
        %v914 = vadd.f32 %v885, 1e-05
        %v915 = vadd.f32 %v887, 1e-05
        %v916 = vadd.f32 %v889, 1e-05
        %v917 = vadd.f32 %v891, 1e-05
        %v918 = vadd.f32 %v893, 1e-05
        %v919 = vadd.f32 %v895, 1e-05
        %v920 = vadd.f32 %v897, 1e-05
        %v921 = vadd.f32 %v899, 1e-05
        %v922 = vadd.f32 %v901, 1e-05
        %v923 = vadd.f32 %v903, 1e-05
        %v924 = vadd.f32 %v905, 1e-05
        %v925 = vadd.f32 %v907, 1e-05
        %v926 = vadd.f32 %v909, 1e-05
        %v927 = vadd.f32 %v911, 1e-05
        %v928 = vlog2.pop %v912
        %v929 = vmul.f32 %v928, 0.6931472
        %v930 = vlog2.pop %v913
        %v931 = vmul.f32 %v930, 0.6931472
        %v932 = vlog2.pop %v914
        %v933 = vmul.f32 %v932, 0.6931472
        %v934 = vlog2.pop %v915
        %v935 = vmul.f32 %v934, 0.6931472
        %v936 = vlog2.pop %v916
        %v937 = vmul.f32 %v936, 0.6931472
        %v938 = vlog2.pop %v917
        %v939 = vmul.f32 %v938, 0.6931472
        %v940 = vlog2.pop %v918
        %v941 = vmul.f32 %v940, 0.6931472
        %v942 = vlog2.pop %v919
        %v943 = vmul.f32 %v942, 0.6931472
        %v944 = vlog2.pop %v920
        %v945 = vmul.f32 %v944, 0.6931472
        %v946 = vlog2.pop %v921
        %v947 = vmul.f32 %v946, 0.6931472
        %v948 = vlog2.pop %v922
        %v949 = vmul.f32 %v948, 0.6931472
        %v950 = vlog2.pop %v923
        %v951 = vmul.f32 %v950, 0.6931472
        %v952 = vlog2.pop %v924
        %v953 = vmul.f32 %v952, 0.6931472
        %v954 = vlog2.pop %v925
        %v955 = vmul.f32 %v954, 0.6931472
        %v956 = vlog2.pop %v926
        %v957 = vmul.f32 %v956, 0.6931472
        %v958 = vlog2.pop %v927
        %v959 = vmul.f32 %v958, 0.6931472
        %s960 = smul.u32 %s21, 128
        %v961 = vlaneseq
        %v962 = vshrl.u32 %v961, 7
        %v963 = vadd.s32 %v962, 8
        %v964 = vadd.s32 %v962, 16
        %v965 = vadd.s32 %v962, 24
        %v966 = vadd.s32 %v962, 32
        %v967 = vadd.s32 %v962, 40
        %v968 = vadd.s32 %v962, 48
        %v969 = vadd.s32 %v962, 56
        %v970 = vadd.s32 %v962, 64
        %v971 = vadd.s32 %v962, 72
        %v972 = vadd.s32 %v962, 80
        %v973 = vadd.s32 %v962, 88
        %v974 = vadd.s32 %v962, 96
        %v975 = vadd.s32 %v962, 104
        %v976 = vadd.s32 %v962, 112
        %v977 = vadd.s32 %v962, 120
        %v978 = vstv %s960
        %v979 = vadd.s32 %v978, %v962
        %v980 = vadd.s32 %v978, %v963
        %v981 = vadd.s32 %v978, %v964
        %v982 = vadd.s32 %v978, %v965
        %v983 = vadd.s32 %v978, %v966
        %v984 = vadd.s32 %v978, %v967
        %v985 = vadd.s32 %v978, %v968
        %v986 = vadd.s32 %v978, %v969
        %v987 = vadd.s32 %v978, %v970
        %v988 = vadd.s32 %v978, %v971
        %v989 = vadd.s32 %v978, %v972
        %v990 = vadd.s32 %v978, %v973
        %v991 = vadd.s32 %v978, %v974
        %v992 = vadd.s32 %v978, %v975
        %v993 = vadd.s32 %v978, %v976
        %v994 = vadd.s32 %v978, %v977
        %v995 = vlaneseq
        %v996 = vand.u32 %v995, 127
        %v997 = vstv %s750
        %v998 = vadd.s32 %v997, %v996
        %vm999 = vcmp.ne.s32.totalorder %v979, %v998
        %vm1000 = vcmp.ne.s32.totalorder %v980, %v998
        %vm1001 = vcmp.ne.s32.totalorder %v981, %v998
        %vm1002 = vcmp.ne.s32.totalorder %v982, %v998
        %vm1003 = vcmp.ne.s32.totalorder %v983, %v998
        %vm1004 = vcmp.ne.s32.totalorder %v984, %v998
        %vm1005 = vcmp.ne.s32.totalorder %v985, %v998
        %vm1006 = vcmp.ne.s32.totalorder %v986, %v998
        %vm1007 = vcmp.ne.s32.totalorder %v987, %v998
        %vm1008 = vcmp.ne.s32.totalorder %v988, %v998
        %vm1009 = vcmp.ne.s32.totalorder %v989, %v998
        %vm1010 = vcmp.ne.s32.totalorder %v990, %v998
        %vm1011 = vcmp.ne.s32.totalorder %v991, %v998
        %vm1012 = vcmp.ne.s32.totalorder %v992, %v998
        %vm1013 = vcmp.ne.s32.totalorder %v993, %v998
        %vm1014 = vcmp.ne.s32.totalorder %v994, %v998
        %vm1015 = vcmp.lt.s32.totalorder %v998, 8
        %vm1016 = vmand %vm999, %vm1015
        %vm1017 = vmand %vm1000, %vm1015
        %vm1018 = vmand %vm1001, %vm1015
        %vm1019 = vmand %vm1002, %vm1015
        %vm1020 = vmand %vm1003, %vm1015
        %vm1021 = vmand %vm1004, %vm1015
        %vm1022 = vmand %vm1005, %vm1015
        %vm1023 = vmand %vm1006, %vm1015
        %vm1024 = vmand %vm1007, %vm1015
        %vm1025 = vmand %vm1008, %vm1015
        %vm1026 = vmand %vm1009, %vm1015
        %vm1027 = vmand %vm1010, %vm1015
        %vm1028 = vmand %vm1011, %vm1015
        %vm1029 = vmand %vm1012, %vm1015
        %vm1030 = vmand %vm1013, %vm1015
        %vm1031 = vmand %vm1014, %vm1015
        %v1032 = vld [vmem:[%s324] sm:$0xff]
        %v1033 = vld [vmem:[%s324 + $0x8] sm:$0xff]
        %v1034 = vld [vmem:[%s324 + $0x10] sm:$0xff]
        %v1035 = vld [vmem:[%s324 + $0x18] sm:$0xff]
        %v1036 = vld [vmem:[%s324 + $0x20] sm:$0xff]
        %v1037 = vld [vmem:[%s324 + $0x28] sm:$0xff]
        %v1038 = vld [vmem:[%s324 + $0x30] sm:$0xff]
        %v1039 = vld [vmem:[%s324 + $0x38] sm:$0xff]
        %v1040 = vld [vmem:[%s324 + $0x40] sm:$0xff]
        %v1041 = vld [vmem:[%s324 + $0x48] sm:$0xff]
        %v1042 = vld [vmem:[%s324 + $0x50] sm:$0xff]
        %v1043 = vld [vmem:[%s324 + $0x58] sm:$0xff]
        %v1044 = vld [vmem:[%s324 + $0x60] sm:$0xff]
        %v1045 = vld [vmem:[%s324 + $0x68] sm:$0xff]
        %v1046 = vld [vmem:[%s324 + $0x70] sm:$0xff]
        %v1047 = vld [vmem:[%s324 + $0x78] sm:$0xff]
        %v1048 = vld [vmem:[%s328] sm:$0x1]
        %1049 = vset.pattern.permute.xlu0 0
        %1050 = vperm.xlu0 %1049, %v1032
        %v1051 = vpop.permute.xlu0 %1050
        %1052 = vset.pattern.permute.xlu0 0
        %1053 = vperm.xlu0 %1052, %v1033
        %v1054 = vpop.permute.xlu0 %1053
        %1055 = vset.pattern.permute.xlu0 0
        %1056 = vperm.xlu0 %1055, %v1034
        %v1057 = vpop.permute.xlu0 %1056
        %1058 = vset.pattern.permute.xlu0 0
        %1059 = vperm.xlu0 %1058, %v1035
        %v1060 = vpop.permute.xlu0 %1059
        %1061 = vset.pattern.permute.xlu0 0
        %1062 = vperm.xlu0 %1061, %v1036
        %v1063 = vpop.permute.xlu0 %1062
        %1064 = vset.pattern.permute.xlu0 0
        %1065 = vperm.xlu0 %1064, %v1037
        %v1066 = vpop.permute.xlu0 %1065
        %1067 = vset.pattern.permute.xlu0 0
        %1068 = vperm.xlu0 %1067, %v1038
        %v1069 = vpop.permute.xlu0 %1068
        %1070 = vset.pattern.permute.xlu0 0
        %1071 = vperm.xlu0 %1070, %v1039
        %v1072 = vpop.permute.xlu0 %1071
        %1073 = vset.pattern.permute.xlu0 0
        %1074 = vperm.xlu0 %1073, %v1040
        %v1075 = vpop.permute.xlu0 %1074
        %1076 = vset.pattern.permute.xlu0 0
        %1077 = vperm.xlu0 %1076, %v1041
        %v1078 = vpop.permute.xlu0 %1077
        %1079 = vset.pattern.permute.xlu0 0
        %1080 = vperm.xlu0 %1079, %v1042
        %v1081 = vpop.permute.xlu0 %1080
        %1082 = vset.pattern.permute.xlu0 0
        %1083 = vperm.xlu0 %1082, %v1043
        %v1084 = vpop.permute.xlu0 %1083
        %1085 = vset.pattern.permute.xlu0 0
        %1086 = vperm.xlu0 %1085, %v1044
        %v1087 = vpop.permute.xlu0 %1086
        %1088 = vset.pattern.permute.xlu0 0
        %1089 = vperm.xlu0 %1088, %v1045
        %v1090 = vpop.permute.xlu0 %1089
        %1091 = vset.pattern.permute.xlu0 0
        %1092 = vperm.xlu0 %1091, %v1046
        %v1093 = vpop.permute.xlu0 %1092
        %1094 = vset.pattern.permute.xlu0 0
        %1095 = vperm.xlu0 %1094, %v1047
        %v1096 = vpop.permute.xlu0 %1095
        %v1097 = vlaneseq
        %v1098 = vshrl.u32 %v1097, 7
        %v1099 = vsub.s32 0, %v1098
        %v1100 = vrot.slane %v1048, %v1099
        %vm1101 = vcmp.eq.s32.totalorder %v1051, %v1100
        %vm1102 = vcmp.eq.s32.totalorder %v1054, %v1100
        %vm1103 = vcmp.eq.s32.totalorder %v1057, %v1100
        %vm1104 = vcmp.eq.s32.totalorder %v1060, %v1100
        %vm1105 = vcmp.eq.s32.totalorder %v1063, %v1100
        %vm1106 = vcmp.eq.s32.totalorder %v1066, %v1100
        %vm1107 = vcmp.eq.s32.totalorder %v1069, %v1100
        %vm1108 = vcmp.eq.s32.totalorder %v1072, %v1100
        %vm1109 = vcmp.eq.s32.totalorder %v1075, %v1100
        %vm1110 = vcmp.eq.s32.totalorder %v1078, %v1100
        %vm1111 = vcmp.eq.s32.totalorder %v1081, %v1100
        %vm1112 = vcmp.eq.s32.totalorder %v1084, %v1100
        %vm1113 = vcmp.eq.s32.totalorder %v1087, %v1100
        %vm1114 = vcmp.eq.s32.totalorder %v1090, %v1100
        %vm1115 = vcmp.eq.s32.totalorder %v1093, %v1100
        %vm1116 = vcmp.eq.s32.totalorder %v1096, %v1100
        %vm1117 = vmand %vm1016, %vm1101
        %vm1118 = vmand %vm1017, %vm1102
        %vm1119 = vmand %vm1018, %vm1103
        %vm1120 = vmand %vm1019, %vm1104
        %vm1121 = vmand %vm1020, %vm1105
        %vm1122 = vmand %vm1021, %vm1106
        %vm1123 = vmand %vm1022, %vm1107
        %vm1124 = vmand %vm1023, %vm1108
        %vm1125 = vmand %vm1024, %vm1109
        %vm1126 = vmand %vm1025, %vm1110
        %vm1127 = vmand %vm1026, %vm1111
        %vm1128 = vmand %vm1027, %vm1112
        %vm1129 = vmand %vm1028, %vm1113
        %vm1130 = vmand %vm1029, %vm1114
        %vm1131 = vmand %vm1030, %vm1115
        %vm1132 = vmand %vm1031, %vm1116
        %v1133 = vsel %vm1016, %v912, 0.0
        %v1134 = vsel %vm1017, %v913, 0.0
        %v1135 = vsel %vm1018, %v914, 0.0
        %v1136 = vsel %vm1019, %v915, 0.0
        %v1137 = vsel %vm1020, %v916, 0.0
        %v1138 = vsel %vm1021, %v917, 0.0
        %v1139 = vsel %vm1022, %v918, 0.0
        %v1140 = vsel %vm1023, %v919, 0.0
        %v1141 = vsel %vm1024, %v920, 0.0
        %v1142 = vsel %vm1025, %v921, 0.0
        %v1143 = vsel %vm1026, %v922, 0.0
        %v1144 = vsel %vm1027, %v923, 0.0
        %v1145 = vsel %vm1028, %v924, 0.0
        %v1146 = vsel %vm1029, %v925, 0.0
        %v1147 = vsel %vm1030, %v926, 0.0
        %v1148 = vsel %vm1031, %v927, 0.0
        %v1149 = vsel %vm1117, %v929, 0.0
        %v1150 = vsel %vm1118, %v931, 0.0
        %v1151 = vsel %vm1119, %v933, 0.0
        %v1152 = vsel %vm1120, %v935, 0.0
        %v1153 = vsel %vm1121, %v937, 0.0
        %v1154 = vsel %vm1122, %v939, 0.0
        %v1155 = vsel %vm1123, %v941, 0.0
        %v1156 = vsel %vm1124, %v943, 0.0
        %v1157 = vsel %vm1125, %v945, 0.0
        %v1158 = vsel %vm1126, %v947, 0.0
        %v1159 = vsel %vm1127, %v949, 0.0
        %v1160 = vsel %vm1128, %v951, 0.0
        %v1161 = vsel %vm1129, %v953, 0.0
        %v1162 = vsel %vm1130, %v955, 0.0
        %v1163 = vsel %vm1131, %v957, 0.0
        %v1164 = vsel %vm1132, %v959, 0.0
        %v1165 = vld [vmem:[#allocation5] sm:$0xff]
        %v1166 = vld [vmem:[#allocation5 + $0x8] sm:$0xff]
        %v1167 = vld [vmem:[#allocation5 + $0x10] sm:$0xff]
        %v1168 = vld [vmem:[#allocation5 + $0x18] sm:$0xff]
        %v1169 = vld [vmem:[#allocation5 + $0x20] sm:$0xff]
        %v1170 = vld [vmem:[#allocation5 + $0x28] sm:$0xff]
        %v1171 = vld [vmem:[#allocation5 + $0x30] sm:$0xff]
        %v1172 = vld [vmem:[#allocation5 + $0x38] sm:$0xff]
        %v1173 = vld [vmem:[#allocation5 + $0x40] sm:$0xff]
        %v1174 = vld [vmem:[#allocation5 + $0x48] sm:$0xff]
        %v1175 = vld [vmem:[#allocation5 + $0x50] sm:$0xff]
        %v1176 = vld [vmem:[#allocation5 + $0x58] sm:$0xff]
        %v1177 = vld [vmem:[#allocation5 + $0x60] sm:$0xff]
        %v1178 = vld [vmem:[#allocation5 + $0x68] sm:$0xff]
        %v1179 = vld [vmem:[#allocation5 + $0x70] sm:$0xff]
        %v1180 = vld [vmem:[#allocation5 + $0x78] sm:$0xff]
        %v1181 = vadd.f32 %v1165, %v1133
        %v1182 = vadd.f32 %v1166, %v1134
        %v1183 = vadd.f32 %v1167, %v1135
        %v1184 = vadd.f32 %v1168, %v1136
        %v1185 = vadd.f32 %v1169, %v1137
        %v1186 = vadd.f32 %v1170, %v1138
        %v1187 = vadd.f32 %v1171, %v1139
        %v1188 = vadd.f32 %v1172, %v1140
        %v1189 = vadd.f32 %v1173, %v1141
        %v1190 = vadd.f32 %v1174, %v1142
        %v1191 = vadd.f32 %v1175, %v1143
        %v1192 = vadd.f32 %v1176, %v1144
        %v1193 = vadd.f32 %v1177, %v1145
        %v1194 = vadd.f32 %v1178, %v1146
        %v1195 = vadd.f32 %v1179, %v1147
        %v1196 = vadd.f32 %v1180, %v1148
        %1197 = vst [vmem:[#allocation5] sm:$0xff] %v1181
        %1198 = vst [vmem:[#allocation5 + $0x8] sm:$0xff] %v1182
        %1199 = vst [vmem:[#allocation5 + $0x10] sm:$0xff] %v1183
        %1200 = vst [vmem:[#allocation5 + $0x18] sm:$0xff] %v1184
        %1201 = vst [vmem:[#allocation5 + $0x20] sm:$0xff] %v1185
        %1202 = vst [vmem:[#allocation5 + $0x28] sm:$0xff] %v1186
        %1203 = vst [vmem:[#allocation5 + $0x30] sm:$0xff] %v1187
        %1204 = vst [vmem:[#allocation5 + $0x38] sm:$0xff] %v1188
        %1205 = vst [vmem:[#allocation5 + $0x40] sm:$0xff] %v1189
        %1206 = vst [vmem:[#allocation5 + $0x48] sm:$0xff] %v1190
        %1207 = vst [vmem:[#allocation5 + $0x50] sm:$0xff] %v1191
        %1208 = vst [vmem:[#allocation5 + $0x58] sm:$0xff] %v1192
        %1209 = vst [vmem:[#allocation5 + $0x60] sm:$0xff] %v1193
        %1210 = vst [vmem:[#allocation5 + $0x68] sm:$0xff] %v1194
        %1211 = vst [vmem:[#allocation5 + $0x70] sm:$0xff] %v1195
        %1212 = vst [vmem:[#allocation5 + $0x78] sm:$0xff] %v1196
        %v1213 = vld [vmem:[#allocation6] sm:$0xff]
        %v1214 = vld [vmem:[#allocation6 + $0x8] sm:$0xff]
        %v1215 = vld [vmem:[#allocation6 + $0x10] sm:$0xff]
        %v1216 = vld [vmem:[#allocation6 + $0x18] sm:$0xff]
        %v1217 = vld [vmem:[#allocation6 + $0x20] sm:$0xff]
        %v1218 = vld [vmem:[#allocation6 + $0x28] sm:$0xff]
        %v1219 = vld [vmem:[#allocation6 + $0x30] sm:$0xff]
        %v1220 = vld [vmem:[#allocation6 + $0x38] sm:$0xff]
        %v1221 = vld [vmem:[#allocation6 + $0x40] sm:$0xff]
        %v1222 = vld [vmem:[#allocation6 + $0x48] sm:$0xff]
        %v1223 = vld [vmem:[#allocation6 + $0x50] sm:$0xff]
        %v1224 = vld [vmem:[#allocation6 + $0x58] sm:$0xff]
        %v1225 = vld [vmem:[#allocation6 + $0x60] sm:$0xff]
        %v1226 = vld [vmem:[#allocation6 + $0x68] sm:$0xff]
        %v1227 = vld [vmem:[#allocation6 + $0x70] sm:$0xff]
        %v1228 = vld [vmem:[#allocation6 + $0x78] sm:$0xff]
        %v1229 = vadd.f32 %v1213, %v1149
        %v1230 = vadd.f32 %v1214, %v1150
        %v1231 = vadd.f32 %v1215, %v1151
        %v1232 = vadd.f32 %v1216, %v1152
        %v1233 = vadd.f32 %v1217, %v1153
        %v1234 = vadd.f32 %v1218, %v1154
        %v1235 = vadd.f32 %v1219, %v1155
        %v1236 = vadd.f32 %v1220, %v1156
        %v1237 = vadd.f32 %v1221, %v1157
        %v1238 = vadd.f32 %v1222, %v1158
        %v1239 = vadd.f32 %v1223, %v1159
        %v1240 = vadd.f32 %v1224, %v1160
        %v1241 = vadd.f32 %v1225, %v1161
        %v1242 = vadd.f32 %v1226, %v1162
        %v1243 = vadd.f32 %v1227, %v1163
        %v1244 = vadd.f32 %v1228, %v1164
        %1245 = vst [vmem:[#allocation6] sm:$0xff] %v1229
        %1246 = vst [vmem:[#allocation6 + $0x8] sm:$0xff] %v1230
        %1247 = vst [vmem:[#allocation6 + $0x10] sm:$0xff] %v1231
        %1248 = vst [vmem:[#allocation6 + $0x18] sm:$0xff] %v1232
        %1249 = vst [vmem:[#allocation6 + $0x20] sm:$0xff] %v1233
        %1250 = vst [vmem:[#allocation6 + $0x28] sm:$0xff] %v1234
        %1251 = vst [vmem:[#allocation6 + $0x30] sm:$0xff] %v1235
        %1252 = vst [vmem:[#allocation6 + $0x38] sm:$0xff] %v1236
        %1253 = vst [vmem:[#allocation6 + $0x40] sm:$0xff] %v1237
        %1254 = vst [vmem:[#allocation6 + $0x48] sm:$0xff] %v1238
        %1255 = vst [vmem:[#allocation6 + $0x50] sm:$0xff] %v1239
        %1256 = vst [vmem:[#allocation6 + $0x58] sm:$0xff] %v1240
        %1257 = vst [vmem:[#allocation6 + $0x60] sm:$0xff] %v1241
        %1258 = vst [vmem:[#allocation6 + $0x68] sm:$0xff] %v1242
        %1259 = vst [vmem:[#allocation6 + $0x70] sm:$0xff] %v1243
        %1260 = vst [vmem:[#allocation6 + $0x78] sm:$0xff] %v1244
        // Predicated region
        $region57: #{tpu_custom_call.1} parent=51 // pred_check
          %p1261 = pneg %p649
        $region58: #{tpu_custom_call.1} parent=51 // pred_check_branch
          %1263 = sbr.rel (%p1261) target = $region60
        $region59: #{tpu_custom_call.1} parent=51 // pred_region
          %v1264 = vld [vmem:[#allocation5] sm:$0xff]
          %v1265 = vld [vmem:[#allocation5 + $0x8] sm:$0xff]
          %v1266 = vld [vmem:[#allocation5 + $0x10] sm:$0xff]
          %v1267 = vld [vmem:[#allocation5 + $0x18] sm:$0xff]
          %v1268 = vld [vmem:[#allocation5 + $0x20] sm:$0xff]
          %v1269 = vld [vmem:[#allocation5 + $0x28] sm:$0xff]
          %v1270 = vld [vmem:[#allocation5 + $0x30] sm:$0xff]
          %v1271 = vld [vmem:[#allocation5 + $0x38] sm:$0xff]
          %v1272 = vld [vmem:[#allocation5 + $0x40] sm:$0xff]
          %v1273 = vld [vmem:[#allocation5 + $0x48] sm:$0xff]
          %v1274 = vld [vmem:[#allocation5 + $0x50] sm:$0xff]
          %v1275 = vld [vmem:[#allocation5 + $0x58] sm:$0xff]
          %v1276 = vld [vmem:[#allocation5 + $0x60] sm:$0xff]
          %v1277 = vld [vmem:[#allocation5 + $0x68] sm:$0xff]
          %v1278 = vld [vmem:[#allocation5 + $0x70] sm:$0xff]
          %v1279 = vld [vmem:[#allocation5 + $0x78] sm:$0xff]
          %1280 = vadd.xlane.f32.xlu0 %v1264
          %v1281 = vpop.xlane.xlu0 %1280
          %1282 = vadd.xlane.f32.xlu0 %v1265
          %v1283 = vpop.xlane.xlu0 %1282
          %1284 = vadd.xlane.f32.xlu0 %v1266
          %v1285 = vpop.xlane.xlu0 %1284
          %1286 = vadd.xlane.f32.xlu0 %v1267
          %v1287 = vpop.xlane.xlu0 %1286
          %1288 = vadd.xlane.f32.xlu0 %v1268
          %v1289 = vpop.xlane.xlu0 %1288
          %1290 = vadd.xlane.f32.xlu0 %v1269
          %v1291 = vpop.xlane.xlu0 %1290
          %1292 = vadd.xlane.f32.xlu0 %v1270
          %v1293 = vpop.xlane.xlu0 %1292
          %1294 = vadd.xlane.f32.xlu0 %v1271
          %v1295 = vpop.xlane.xlu0 %1294
          %1296 = vadd.xlane.f32.xlu0 %v1272
          %v1297 = vpop.xlane.xlu0 %1296
          %1298 = vadd.xlane.f32.xlu0 %v1273
          %v1299 = vpop.xlane.xlu0 %1298
          %1300 = vadd.xlane.f32.xlu0 %v1274
          %v1301 = vpop.xlane.xlu0 %1300
          %1302 = vadd.xlane.f32.xlu0 %v1275
          %v1303 = vpop.xlane.xlu0 %1302
          %1304 = vadd.xlane.f32.xlu0 %v1276
          %v1305 = vpop.xlane.xlu0 %1304
          %1306 = vadd.xlane.f32.xlu0 %v1277
          %v1307 = vpop.xlane.xlu0 %1306
          %1308 = vadd.xlane.f32.xlu0 %v1278
          %v1309 = vpop.xlane.xlu0 %1308
          %1310 = vadd.xlane.f32.xlu0 %v1279
          %v1311 = vpop.xlane.xlu0 %1310
          %v1312 = vld [vmem:[#allocation6] sm:$0xff]
          %v1313 = vld [vmem:[#allocation6 + $0x8] sm:$0xff]
          %v1314 = vld [vmem:[#allocation6 + $0x10] sm:$0xff]
          %v1315 = vld [vmem:[#allocation6 + $0x18] sm:$0xff]
          %v1316 = vld [vmem:[#allocation6 + $0x20] sm:$0xff]
          %v1317 = vld [vmem:[#allocation6 + $0x28] sm:$0xff]
          %v1318 = vld [vmem:[#allocation6 + $0x30] sm:$0xff]
          %v1319 = vld [vmem:[#allocation6 + $0x38] sm:$0xff]
          %v1320 = vld [vmem:[#allocation6 + $0x40] sm:$0xff]
          %v1321 = vld [vmem:[#allocation6 + $0x48] sm:$0xff]
          %v1322 = vld [vmem:[#allocation6 + $0x50] sm:$0xff]
          %v1323 = vld [vmem:[#allocation6 + $0x58] sm:$0xff]
          %v1324 = vld [vmem:[#allocation6 + $0x60] sm:$0xff]
          %v1325 = vld [vmem:[#allocation6 + $0x68] sm:$0xff]
          %v1326 = vld [vmem:[#allocation6 + $0x70] sm:$0xff]
          %v1327 = vld [vmem:[#allocation6 + $0x78] sm:$0xff]
          %1328 = vadd.xlane.f32.xlu0 %v1312
          %v1329 = vpop.xlane.xlu0 %1328
          %1330 = vadd.xlane.f32.xlu0 %v1313
          %v1331 = vpop.xlane.xlu0 %1330
          %1332 = vadd.xlane.f32.xlu0 %v1314
          %v1333 = vpop.xlane.xlu0 %1332
          %1334 = vadd.xlane.f32.xlu0 %v1315
          %v1335 = vpop.xlane.xlu0 %1334
          %1336 = vadd.xlane.f32.xlu0 %v1316
          %v1337 = vpop.xlane.xlu0 %1336
          %1338 = vadd.xlane.f32.xlu0 %v1317
          %v1339 = vpop.xlane.xlu0 %1338
          %1340 = vadd.xlane.f32.xlu0 %v1318
          %v1341 = vpop.xlane.xlu0 %1340
          %1342 = vadd.xlane.f32.xlu0 %v1319
          %v1343 = vpop.xlane.xlu0 %1342
          %1344 = vadd.xlane.f32.xlu0 %v1320
          %v1345 = vpop.xlane.xlu0 %1344
          %1346 = vadd.xlane.f32.xlu0 %v1321
          %v1347 = vpop.xlane.xlu0 %1346
          %1348 = vadd.xlane.f32.xlu0 %v1322
          %v1349 = vpop.xlane.xlu0 %1348
          %1350 = vadd.xlane.f32.xlu0 %v1323
          %v1351 = vpop.xlane.xlu0 %1350
          %1352 = vadd.xlane.f32.xlu0 %v1324
          %v1353 = vpop.xlane.xlu0 %1352
          %1354 = vadd.xlane.f32.xlu0 %v1325
          %v1355 = vpop.xlane.xlu0 %1354
          %1356 = vadd.xlane.f32.xlu0 %v1326
          %v1357 = vpop.xlane.xlu0 %1356
          %1358 = vadd.xlane.f32.xlu0 %v1327
          %v1359 = vpop.xlane.xlu0 %1358
          %v1360 = vld [vmem:[%s333] sm:$0xff]
          %v1361 = vld [vmem:[%s333 + $0x8] sm:$0xff]
          %v1362 = vld [vmem:[%s333 + $0x10] sm:$0xff]
          %v1363 = vld [vmem:[%s333 + $0x18] sm:$0xff]
          %v1364 = vld [vmem:[%s333 + $0x20] sm:$0xff]
          %v1365 = vld [vmem:[%s333 + $0x28] sm:$0xff]
          %v1366 = vld [vmem:[%s333 + $0x30] sm:$0xff]
          %v1367 = vld [vmem:[%s333 + $0x38] sm:$0xff]
          %v1368 = vld [vmem:[%s333 + $0x40] sm:$0xff]
          %v1369 = vld [vmem:[%s333 + $0x48] sm:$0xff]
          %v1370 = vld [vmem:[%s333 + $0x50] sm:$0xff]
          %v1371 = vld [vmem:[%s333 + $0x58] sm:$0xff]
          %v1372 = vld [vmem:[%s333 + $0x60] sm:$0xff]
          %v1373 = vld [vmem:[%s333 + $0x68] sm:$0xff]
          %v1374 = vld [vmem:[%s333 + $0x70] sm:$0xff]
          %v1375 = vld [vmem:[%s333 + $0x78] sm:$0xff]
          %v1376 = vlog2.pop %v1281
          %v1377 = vmul.f32 %v1376, 0.6931472
          %v1378 = vlog2.pop %v1283
          %v1379 = vmul.f32 %v1378, 0.6931472
          %v1380 = vlog2.pop %v1285
          %v1381 = vmul.f32 %v1380, 0.6931472
          %v1382 = vlog2.pop %v1287
          %v1383 = vmul.f32 %v1382, 0.6931472
          %v1384 = vlog2.pop %v1289
          %v1385 = vmul.f32 %v1384, 0.6931472
          %v1386 = vlog2.pop %v1291
          %v1387 = vmul.f32 %v1386, 0.6931472
          %v1388 = vlog2.pop %v1293
          %v1389 = vmul.f32 %v1388, 0.6931472
          %v1390 = vlog2.pop %v1295
          %v1391 = vmul.f32 %v1390, 0.6931472
          %v1392 = vlog2.pop %v1297
          %v1393 = vmul.f32 %v1392, 0.6931472
          %v1394 = vlog2.pop %v1299
          %v1395 = vmul.f32 %v1394, 0.6931472
          %v1396 = vlog2.pop %v1301
          %v1397 = vmul.f32 %v1396, 0.6931472
          %v1398 = vlog2.pop %v1303
          %v1399 = vmul.f32 %v1398, 0.6931472
          %v1400 = vlog2.pop %v1305
          %v1401 = vmul.f32 %v1400, 0.6931472
          %v1402 = vlog2.pop %v1307
          %v1403 = vmul.f32 %v1402, 0.6931472
          %v1404 = vlog2.pop %v1309
          %v1405 = vmul.f32 %v1404, 0.6931472
          %v1406 = vlog2.pop %v1311
          %v1407 = vmul.f32 %v1406, 0.6931472
          %v1408 = vmul.f32 %v1360, %v1377
          %v1409 = vmul.f32 %v1361, %v1379
          %v1410 = vmul.f32 %v1362, %v1381
          %v1411 = vmul.f32 %v1363, %v1383
          %v1412 = vmul.f32 %v1364, %v1385
          %v1413 = vmul.f32 %v1365, %v1387
          %v1414 = vmul.f32 %v1366, %v1389
          %v1415 = vmul.f32 %v1367, %v1391
          %v1416 = vmul.f32 %v1368, %v1393
          %v1417 = vmul.f32 %v1369, %v1395
          %v1418 = vmul.f32 %v1370, %v1397
          %v1419 = vmul.f32 %v1371, %v1399
          %v1420 = vmul.f32 %v1372, %v1401
          %v1421 = vmul.f32 %v1373, %v1403
          %v1422 = vmul.f32 %v1374, %v1405
          %v1423 = vmul.f32 %v1375, %v1407
          %v1424 = vsub.f32 %v1408, %v1329
          %v1425 = vsub.f32 %v1409, %v1331
          %v1426 = vsub.f32 %v1410, %v1333
          %v1427 = vsub.f32 %v1411, %v1335
          %v1428 = vsub.f32 %v1412, %v1337
          %v1429 = vsub.f32 %v1413, %v1339
          %v1430 = vsub.f32 %v1414, %v1341
          %v1431 = vsub.f32 %v1415, %v1343
          %v1432 = vsub.f32 %v1416, %v1345
          %v1433 = vsub.f32 %v1417, %v1347
          %v1434 = vsub.f32 %v1418, %v1349
          %v1435 = vsub.f32 %v1419, %v1351
          %v1436 = vsub.f32 %v1420, %v1353
          %v1437 = vsub.f32 %v1421, %v1355
          %v1438 = vsub.f32 %v1422, %v1357
          %v1439 = vsub.f32 %v1423, %v1359
          %v1440 = vrcp.pop %v1360
          %v1441 = vmul.f32 %v1424, %v1440
          %v1442 = vrcp.pop %v1361
          %v1443 = vmul.f32 %v1425, %v1442
          %v1444 = vrcp.pop %v1362
          %v1445 = vmul.f32 %v1426, %v1444
          %v1446 = vrcp.pop %v1363
          %v1447 = vmul.f32 %v1427, %v1446
          %v1448 = vrcp.pop %v1364
          %v1449 = vmul.f32 %v1428, %v1448
          %v1450 = vrcp.pop %v1365
          %v1451 = vmul.f32 %v1429, %v1450
          %v1452 = vrcp.pop %v1366
          %v1453 = vmul.f32 %v1430, %v1452
          %v1454 = vrcp.pop %v1367
          %v1455 = vmul.f32 %v1431, %v1454
          %v1456 = vrcp.pop %v1368
          %v1457 = vmul.f32 %v1432, %v1456
          %v1458 = vrcp.pop %v1369
          %v1459 = vmul.f32 %v1433, %v1458
          %v1460 = vrcp.pop %v1370
          %v1461 = vmul.f32 %v1434, %v1460
          %v1462 = vrcp.pop %v1371
          %v1463 = vmul.f32 %v1435, %v1462
          %v1464 = vrcp.pop %v1372
          %v1465 = vmul.f32 %v1436, %v1464
          %v1466 = vrcp.pop %v1373
          %v1467 = vmul.f32 %v1437, %v1466
          %v1468 = vrcp.pop %v1374
          %v1469 = vmul.f32 %v1438, %v1468
          %v1470 = vrcp.pop %v1375
          %v1471 = vmul.f32 %v1439, %v1470
          %vm1472 = vcmask 7168
          %1473 = vst.msk [vmem:[%s339] sm:$0xff] %vm1472, %v1441
          %1474 = vst.msk [vmem:[%s339 + $0x8] sm:$0xff] %vm1472, %v1443
          %1475 = vst.msk [vmem:[%s339 + $0x10] sm:$0xff] %vm1472, %v1445
          %1476 = vst.msk [vmem:[%s339 + $0x18] sm:$0xff] %vm1472, %v1447
          %1477 = vst.msk [vmem:[%s339 + $0x20] sm:$0xff] %vm1472, %v1449
          %1478 = vst.msk [vmem:[%s339 + $0x28] sm:$0xff] %vm1472, %v1451
          %1479 = vst.msk [vmem:[%s339 + $0x30] sm:$0xff] %vm1472, %v1453
          %1480 = vst.msk [vmem:[%s339 + $0x38] sm:$0xff] %vm1472, %v1455
          %1481 = vst.msk [vmem:[%s339 + $0x40] sm:$0xff] %vm1472, %v1457
          %1482 = vst.msk [vmem:[%s339 + $0x48] sm:$0xff] %vm1472, %v1459
          %1483 = vst.msk [vmem:[%s339 + $0x50] sm:$0xff] %vm1472, %v1461
          %1484 = vst.msk [vmem:[%s339 + $0x58] sm:$0xff] %vm1472, %v1463
          %1485 = vst.msk [vmem:[%s339 + $0x60] sm:$0xff] %vm1472, %v1465
          %1486 = vst.msk [vmem:[%s339 + $0x68] sm:$0xff] %vm1472, %v1467
          %1487 = vst.msk [vmem:[%s339 + $0x70] sm:$0xff] %vm1472, %v1469
          %1488 = vst.msk [vmem:[%s339 + $0x78] sm:$0xff] %vm1472, %v1471
        $region60: #{tpu_custom_call.1} parent=51 // pred_fallthru
          _
      $region52: #{tpu_custom_call.1} parent=39 // pred_fallthru
        _
      %s1489 = smul.u32 16, %s21
      %p1490 = scmp.lt.s32.totalorder %s1489, 15
      %s1491 = scalar_select %p1490, %s1489, 15
      %s1492 = smul.addr %s1491, 8
      %s1493 = scalar_lea.vmem %s5, %s1492
      // Predicated region
      $region61: #{tpu_custom_call.1} parent=39 // pred_check
        %p1494 = pneg %p187
      $region62: #{tpu_custom_call.1} parent=39 // pred_check_branch
        %1496 = sbr.rel (%p1494) target = $region64
      $region63: #{tpu_custom_call.1} parent=39 // pred_region
        %s1497 = smul.u32 16, %s21
      $region64: #{tpu_custom_call.1} parent=39 // pred_fallthru
        _
      // Predicated region
      $region65: #{tpu_custom_call.1} parent=39 // pred_check
        %p1498 = pneg %p187
      $region66: #{tpu_custom_call.1} parent=39 // pred_check_branch
        %1500 = sbr.rel (%p1498) target = $region68
      $region67: #{tpu_custom_call.1} parent=39 // pred_region
        %s1501 = smul.u32 16, %s21
        %p1502 = scmp.lt.s32.totalorder %s1501, 15
        %s1503 = scalar_select %p1502, %s1501, 15
        %s1504 = smul.addr %s1503, 8
        %s1505 = scalar_lea.vmem %s5, %s1504
      $region68: #{tpu_custom_call.1} parent=39 // pred_fallthru
        _
    $region40: #{tpu_custom_call.1} parent=5 // pred_fallthru
      _
    %p1506 = scmp.le.s32.totalorder 2, %s11
    // Predicated region
    $region69: #{tpu_custom_call.1} parent=5 // pred_check
      %p1507 = pneg %p1506
    $region70: #{tpu_custom_call.1} parent=5 // pred_check_branch
      %1509 = sbr.rel (%p1507) target = $region72
    $region71: #{tpu_custom_call.1} parent=5 // pred_region
      %s1510 = ssub.s32 %s11, 2
    $region72: #{tpu_custom_call.1} parent=5 // pred_fallthru
      _
  $region6: #{tpu_custom_call.1} parent=0 // loop_footer
    %s15 = sadd.s32 1, %s11
  $region7: #{tpu_custom_call.1} parent=0 // loop_footer_branch
    %10 = sbr.rel target = $region3
  $region8: #{tpu_custom_call.1} parent=0 // loop_exit
    _

</llo_original>
